<compile_context>
chip_gen: v7x
topology: tpu7x:2x2x1
jax: 0.10.0
libtpu: 0.0.40
codegen_flags: <defaults>
</compile_context>

<pallas_src>
import numpy as np
import jax
import jax.numpy as jnp
from jax import lax
from jax.experimental import pallas as pl
from jax.experimental.pallas import tpu as pltpu


def _surfmnet_kernel(c12_ref, c21_ref, e1_ref, e2_ref, e1t_ref, e2t_ref,
                     f1_ref, f2_ref, evp_ref, out_ref):
    f32 = jnp.float32
    bf16 = jnp.bfloat16
    B, K, _ = c12_ref.shape          # batch block, spectral dim
    nd, V = f1_ref.shape[1], f1_ref.shape[2]

    c12 = c12_ref[...]               # (B, K, K) f32
    c21 = c21_ref[...]
    evp = evp_ref[...]               # (B, 2, K) f32
    ev1 = evp[:, 0:1, :]             # (B, 1, K)
    ev2 = evp[:, 1:2, :]

    eye = (lax.broadcasted_iota(jnp.int32, (K, K), 0)
           == lax.broadcasted_iota(jnp.int32, (K, K), 1)).astype(f32)
    ones_kk = jnp.ones((K, K), f32)

    # ---- Laplacian commutativity (block-vectorized, f32) --------------------
    # col{1,2}[b, i, j] = ev{1,2}[b, i], built via (eye * ev_row) @ ones so no
    # lane->sublane transpose is needed.
    diag1 = (eye[None, :, :] * ev1).reshape(B * K, K)
    diag2 = (eye[None, :, :] * ev2).reshape(B * K, K)
    col1 = jnp.dot(diag1, ones_kk, preferred_element_type=f32).reshape(B, K, K)
    col2 = jnp.dot(diag2, ones_kk, preferred_element_type=f32).reshape(B, K, K)
    lap_d1 = c12 * ev1 - col2 * c12
    lap_d2 = c21 * ev2 - col1 * c21
    acc_lap = jnp.sum(lap_d1 * lap_d1 + lap_d2 * lap_d2, axis=0)   # (K, K)

    # ---- per-batch work with (K, K) accumulators -----------------------------
    acc_bij = jnp.zeros((K, K), f32)
    acc_orth = jnp.zeros((K, K), f32)
    acc_pre = jnp.zeros((K, K), f32)

    for b in range(B):               # B is small (<= 8), static unroll
        c12b = c12[b]
        c21b = c21[b]

        # bijectivity: ||C12 C21 - I||^2 + ||C21 C12 - I||^2   (f32, tiny)
        d = jnp.dot(c12b, c21b, preferred_element_type=f32) - eye
        acc_bij = acc_bij + d * d
        d = jnp.dot(c21b, c12b, preferred_element_type=f32) - eye
        acc_bij = acc_bij + d * d

        # orthogonality: ||C^T C - I||^2 (C^T C without materializing C^T)
        d = lax.dot_general(c12b, c12b, (((0,), (0,)), ((), ())),
                            preferred_element_type=f32) - eye
        acc_orth = acc_orth + d * d
        d = lax.dot_general(c21b, c21b, (((0,), (0,)), ((), ())),
                            preferred_element_type=f32) - eye
        acc_orth = acc_orth + d * d

        # ---- descriptor preservation via commutativity (fused bf16 MXU) -----
        c12_bf = c12b.astype(bf16)
        c21_bf = c21b.astype(bf16)
        e1b = e1_ref[b]              # (V, K) bf16
        e2b = e2_ref[b]
        e1tb = e1t_ref[b]            # (K, V) bf16
        e2tb = e2t_ref[b]
        f1b = f1_ref[b]              # (nd, V) bf16
        f2b = f2_ref[b]

        # Fold C into the eigenbasis once per direction.
        B1 = jnp.dot(c12_bf, e1tb, preferred_element_type=f32).astype(bf16)  # C12 Phi1+  (K,V)
        B2 = jnp.dot(c21_bf, e2tb, preferred_element_type=f32).astype(bf16)  # C21 Phi2+  (K,V)
        D1 = jnp.dot(e2b, c12_bf, preferred_element_type=f32).astype(bf16)   # Phi2 C12   (V,K)
        D2 = jnp.dot(e1b, c21_bf, preferred_element_type=f32).astype(bf16)   # Phi1 C21   (V,K)

        # d1_i = C12 M1_i - M2_i C12 = [B1*f1_i | -Phi2+*f2_i] @ [Phi1 ; Phi2 C12]
        # d2_i = C21 M2_i - M1_i C21 = [B2*f2_i | -Phi1+*f1_i] @ [Phi2 ; Phi1 C21]
        fcat12 = jnp.concatenate([f1b, f2b], axis=1)                          # (nd, 2V)
        fcat21 = jnp.concatenate([f2b, f1b], axis=1)
        bcat1 = jnp.concatenate([B1, -e2tb], axis=1)                          # (K, 2V)
        bcat2 = jnp.concatenate([B2, -e1tb], axis=1)
        lhs1 = (fcat12[:, None, :] * bcat1[None, :, :]).reshape(nd * K, 2 * V)
        lhs2 = (fcat21[:, None, :] * bcat2[None, :, :]).reshape(nd * K, 2 * V)
        rhs1 = jnp.concatenate([e1b, D1], axis=0)                             # (2V, K)
        rhs2 = jnp.concatenate([e2b, D2], axis=0)
        d1 = jnp.dot(lhs1, rhs1, preferred_element_type=f32)                  # (nd*K, K) f32
        d2 = jnp.dot(lhs2, rhs2, preferred_element_type=f32)
        acc_pre = acc_pre + jnp.sum((d1 * d1 + d2 * d2).reshape(nd, K, K), axis=0)

    # ---- 4 cross-lane reductions per grid step --------------------------------
    bij = jnp.sum(acc_bij, keepdims=True)     # (1, 1)
    orth = jnp.sum(acc_orth, keepdims=True)
    lap = jnp.sum(acc_lap, keepdims=True)
    pre = jnp.sum(acc_pre, keepdims=True)

    # Pack the four per-block partial sums into a lane-dense (1, 128) row.
    lane = lax.broadcasted_iota(jnp.int32, (1, 128), 1)
    zeros = jnp.zeros((1, 128), f32)
    vals = (jnp.where(lane == 0, bij, zeros)
            + jnp.where(lane == 1, orth, zeros)
            + jnp.where(lane == 2, lap, zeros)
            + jnp.where(lane == 3, pre, zeros))
    out_ref[0] = vals


def _pick_block(N, max_b=8):
    # Keep >= 2 grid steps when possible (v7x has 2 TensorCores / chip).
    cap = min(max_b, max(1, (N + 1) // 2))
    for b in range(cap, 0, -1):
        if N % b == 0:
            return b
    return 1


def surfmnet_loss_pallas(C12, C21, feat_1, feat_2, evecs_1, evecs_2,
                         evecs_trans1, evecs_trans2, evals_1, evals_2,
                         desc_ind,
                         w_bij=1000.0, w_orth=1000.0, w_lap=1.0, w_pre=100000.0,
                         block_batch=None):
    f32 = jnp.float32
    bf16 = jnp.bfloat16
    C12 = C12.astype(f32)
    C21 = C21.astype(f32)
    N, K, _ = C12.shape
    V = evecs_1.shape[1]
    num_desc = int(len(desc_ind))

    # Glue: descriptor subsampling + layout plumbing (plain JAX, tiny arrays).
    f1s = jnp.transpose(feat_1[:, :, desc_ind], (0, 2, 1)).astype(bf16)   # (N, nd, V)
    f2s = jnp.transpose(feat_2[:, :, desc_ind], (0, 2, 1)).astype(bf16)
    e1 = evecs_1.astype(bf16)                                            # (N, V, K)
    e2 = evecs_2.astype(bf16)
    e1t = evecs_trans1.astype(bf16)                                      # (N, K, V)
    e2t = evecs_trans2.astype(bf16)
    evp = jnp.stack([evals_1.astype(f32), evals_2.astype(f32)], axis=1)  # (N, 2, K)

    B = _pick_block(N) if block_batch is None else int(block_batch)
    assert N % B == 0, "batch block must divide N"
    G = N // B

    out = pl.pallas_call(
        _surfmnet_kernel,
        out_shape=jax.ShapeDtypeStruct((G, 1, 128), f32),
        grid_spec=pltpu.PrefetchScalarGridSpec(
            num_scalar_prefetch=0,
            grid=(G,),
            in_specs=[
                pl.BlockSpec((B, K, K), lambda n: (n, 0, 0)),          # C12
                pl.BlockSpec((B, K, K), lambda n: (n, 0, 0)),          # C21
                pl.BlockSpec((B, V, K), lambda n: (n, 0, 0)),          # evecs_1
                pl.BlockSpec((B, V, K), lambda n: (n, 0, 0)),          # evecs_2
                pl.BlockSpec((B, K, V), lambda n: (n, 0, 0)),          # evecs_trans1
                pl.BlockSpec((B, K, V), lambda n: (n, 0, 0)),          # evecs_trans2
                pl.BlockSpec((B, num_desc, V), lambda n: (n, 0, 0)),   # feats 1
                pl.BlockSpec((B, num_desc, V), lambda n: (n, 0, 0)),   # feats 2
                pl.BlockSpec((B, 2, K), lambda n: (n, 0, 0)),          # packed evals
            ],
            out_specs=pl.BlockSpec((1, 1, 128), lambda n: (n, 0, 0)),
        ),
        compiler_params=pltpu.CompilerParams(dimension_semantics=("parallel",)),
    )(C12, C21, e1, e2, e1t, e2t, f1s, f2s, evp)

    # FrobeniusLoss = mean over leading dims of sum over last-two dims.
    sums = jnp.sum(out[:, 0, :4], axis=0)          # (4,) totals across blocks
    l_bij = w_bij * sums[0] / N
    l_orth = w_orth * sums[1] / N
    l_lap = w_lap * sums[2] / N
    l_pre = w_pre * sums[3] / (N * num_desc)
    return {'l_bij': l_bij, 'l_orth': l_orth, 'l_lap': l_lap, 'l_pre': l_pre}


def surfmnet_loss_ref(C12, C21, feat_1, feat_2, evecs_1, evecs_2,
                      evecs_trans1, evecs_trans2, evals_1, evals_2, desc_ind,
                      w_bij=1000.0, w_orth=1000.0, w_lap=1.0, w_pre=100000.0):
    """Pure-JAX reference mirroring the PyTorch forward (f32)."""
    def frob(a, b):
        return jnp.mean(jnp.sum((a - b) ** 2, axis=(-2, -1)))

    N, K, _ = C12.shape
    eye = jnp.eye(K, dtype=C12.dtype)[None]
    bij = frob(C12 @ C21, eye) + frob(C21 @ C12, eye)
    orth = (frob(jnp.swapaxes(C12, 1, 2) @ C12, eye)
            + frob(jnp.swapaxes(C21, 1, 2) @ C21, eye))
    lap = (frob(C12 * evals_1[:, None, :], evals_2[:, :, None] * C12)
           + frob(C21 * evals_2[:, None, :], evals_1[:, :, None] * C21))

    f1 = jnp.transpose(feat_1[:, :, desc_ind], (0, 2, 1))   # (N, nd, V)
    f2 = jnp.transpose(feat_2[:, :, desc_ind], (0, 2, 1))
    M1 = jnp.einsum('akv,aiv,avl->aikl', evecs_trans1, f1, evecs_1)   # (N, nd, K, K)
    M2 = jnp.einsum('akv,aiv,avl->aikl', evecs_trans2, f2, evecs_2)
    s1 = jnp.einsum('akl,ailm->aikm', C12, M1)
    t1 = jnp.einsum('aikl,alm->aikm', M2, C12)
    s2 = jnp.einsum('akl,ailm->aikm', C21, M2)
    t2 = jnp.einsum('aikl,alm->aikm', M1, C21)
    pre = frob(s1, t1) + frob(s2, t2)

    return {'l_bij': w_bij * bij, 'l_orth': w_orth * orth,
            'l_lap': w_lap * lap, 'l_pre': w_pre * pre}


if __name__ == "__main__":
    N, V, K, C = 2, 128, 32, 32
    sub_pre = 0.2

    key = jax.random.PRNGKey(0)
    ks = jax.random.split(key, 10)
    C12 = 0.1 * jax.random.normal(ks[0], (N, K, K), jnp.float32)
    C21 = 0.1 * jax.random.normal(ks[1], (N, K, K), jnp.float32)
    feat_1 = jax.random.normal(ks[2], (N, V, C), jnp.float32)
    feat_2 = jax.random.normal(ks[3], (N, V, C), jnp.float32)
    evecs_1 = 0.1 * jax.random.normal(ks[4], (N, V, K), jnp.float32)
    evecs_2 = 0.1 * jax.random.normal(ks[5], (N, V, K), jnp.float32)
    evecs_trans1 = 0.1 * jax.random.normal(ks[6], (N, K, V), jnp.float32)
    evecs_trans2 = 0.1 * jax.random.normal(ks[7], (N, K, V), jnp.float32)
    evals_1 = jax.random.uniform(ks[8], (N, K), jnp.float32)
    evals_2 = jax.random.uniform(ks[9], (N, K), jnp.float32)

    # TODO(synk): original uses an unseeded np.random.choice; made deterministic here.
    num_desc = int(C * sub_pre)
    rng = np.random.default_rng(0)
    desc_ind = np.sort(rng.choice(C, num_desc, replace=False))

    losses = surfmnet_loss_pallas(C12, C21, feat_1, feat_2, evecs_1, evecs_2,
                                  evecs_trans1, evecs_trans2, evals_1, evals_2,
                                  desc_ind)
    for v in losses.values():
        jax.block_until_ready(v)

    ref = surfmnet_loss_ref(C12, C21, feat_1, feat_2, evecs_1, evecs_2,
                            evecs_trans1, evecs_trans2, evals_1, evals_2,
                            desc_ind)
    for name in ('l_bij', 'l_orth', 'l_lap', 'l_pre'):
        np.testing.assert_allclose(float(losses[name]), float(ref[name]),
                                   rtol=5e-2, atol=1e-4)

    print("KERNEL_OK")
</pallas_src>

<mosaic_0001>
module attributes {stable_mosaic.version = 11 : i64} {
  func.func @_surfmnet_kernel(%arg0: i32, %arg1: memref<1x32x32xf32, #tpu.memory_space<vmem>>, %arg2: memref<1x32x32xf32, #tpu.memory_space<vmem>>, %arg3: memref<1x128x32xbf16, #tpu.memory_space<vmem>>, %arg4: memref<1x128x32xbf16, #tpu.memory_space<vmem>>, %arg5: memref<1x32x128xbf16, #tpu.memory_space<vmem>>, %arg6: memref<1x32x128xbf16, #tpu.memory_space<vmem>>, %arg7: memref<1x6x128xbf16, #tpu.memory_space<vmem>>, %arg8: memref<1x6x128xbf16, #tpu.memory_space<vmem>>, %arg9: memref<1x2x32xf32, #tpu.memory_space<vmem>>, %arg10: memref<1x1x128xf32, #tpu.memory_space<vmem>>) attributes {dimension_semantics = [#tpu.dimension_semantics<parallel>], iteration_bounds = array<i64: 2>, scalar_prefetch = 0 : i64, scratch_operands = 0 : i64, tpu.core_type = #tpu.core_type<tc>, window_params = [{transform_indices = @transform_0, window_bounds = array<i64: 1, 32, 32>}, {transform_indices = @transform_1, window_bounds = array<i64: 1, 32, 32>}, {transform_indices = @transform_2, window_bounds = array<i64: 1, 128, 32>}, {transform_indices = @transform_3, window_bounds = array<i64: 1, 128, 32>}, {transform_indices = @transform_4, window_bounds = array<i64: 1, 32, 128>}, {transform_indices = @transform_5, window_bounds = array<i64: 1, 32, 128>}, {transform_indices = @transform_6, window_bounds = array<i64: 1, 6, 128>}, {transform_indices = @transform_7, window_bounds = array<i64: 1, 6, 128>}, {transform_indices = @transform_8, window_bounds = array<i64: 1, 2, 32>}, {transform_indices = @transform_9, window_bounds = array<i64: 1, 1, 128>}]} {
    %c0 = arith.constant 0 : index
    %c0_0 = arith.constant 0 : index
    %c0_1 = arith.constant 0 : index
    %0 = vector.load %arg1[%c0, %c0_0, %c0_1] : memref<1x32x32xf32, #tpu.memory_space<vmem>>, vector<1x32x32xf32>
    %c0_2 = arith.constant 0 : index
    %c0_3 = arith.constant 0 : index
    %c0_4 = arith.constant 0 : index
    %1 = vector.load %arg2[%c0_2, %c0_3, %c0_4] : memref<1x32x32xf32, #tpu.memory_space<vmem>>, vector<1x32x32xf32>
    %c0_5 = arith.constant 0 : index
    %c0_6 = arith.constant 0 : index
    %c0_7 = arith.constant 0 : index
    %2 = vector.load %arg9[%c0_5, %c0_6, %c0_7] : memref<1x2x32xf32, #tpu.memory_space<vmem>>, vector<1x2x32xf32>
    %3 = vector.extract_strided_slice %2 {offsets = [0, 0, 0], sizes = [1, 1, 32], strides = [1, 1, 1]} : vector<1x2x32xf32> to vector<1x1x32xf32>
    %4 = vector.extract_strided_slice %2 {offsets = [0, 1, 0], sizes = [1, 1, 32], strides = [1, 1, 1]} : vector<1x2x32xf32> to vector<1x1x32xf32>
    %5 = tpu.iota {dimensions = array<i32: 0>} : vector<32x32xi32>
    %6 = tpu.iota {dimensions = array<i32: 1>} : vector<32x32xi32>
    %7 = arith.cmpi eq, %5, %6 : vector<32x32xi32>
    %8 = arith.extui %7 : vector<32x32xi1> to vector<32x32xi32>
    %9 = arith.sitofp %8 : vector<32x32xi32> to vector<32x32xf32>
    %cst = arith.constant 1.000000e+00 : f32
    %10 = vector.broadcast %cst : f32 to vector<32x32xf32>
    %11 = vector.shape_cast %9 : vector<32x32xf32> to vector<1x32x32xf32>
    %12 = vector.broadcast %3 : vector<1x1x32xf32> to vector<1x32x32xf32>
    %13 = arith.mulf %11, %12 : vector<1x32x32xf32>
    %14 = vector.shape_cast %13 : vector<1x32x32xf32> to vector<32x32xf32>
    %15 = vector.shape_cast %9 : vector<32x32xf32> to vector<1x32x32xf32>
    %16 = vector.broadcast %4 : vector<1x1x32xf32> to vector<1x32x32xf32>
    %17 = arith.mulf %15, %16 : vector<1x32x32xf32>
    %18 = vector.shape_cast %17 : vector<1x32x32xf32> to vector<32x32xf32>
    %cst_8 = arith.constant dense<0.000000e+00> : vector<32x32xf32>
    %19 = tpu.matmul %14, %10, %cst_8 {dimension_numbers = #tpu.dot_dimension_numbers<[1], [0], [0], [1], [0, 0, 1, 1], [], []>} : vector<32x32xf32>, vector<32x32xf32>, vector<32x32xf32> -> vector<32x32xf32>
    %20 = vector.shape_cast %19 : vector<32x32xf32> to vector<1x32x32xf32>
    %cst_9 = arith.constant dense<0.000000e+00> : vector<32x32xf32>
    %21 = tpu.matmul %18, %10, %cst_9 {dimension_numbers = #tpu.dot_dimension_numbers<[1], [0], [0], [1], [0, 0, 1, 1], [], []>} : vector<32x32xf32>, vector<32x32xf32>, vector<32x32xf32> -> vector<32x32xf32>
    %22 = vector.shape_cast %21 : vector<32x32xf32> to vector<1x32x32xf32>
    %23 = vector.broadcast %3 : vector<1x1x32xf32> to vector<1x32x32xf32>
    %24 = arith.mulf %0, %23 : vector<1x32x32xf32>
    %25 = arith.mulf %22, %0 : vector<1x32x32xf32>
    %26 = arith.subf %24, %25 : vector<1x32x32xf32>
    %27 = vector.broadcast %4 : vector<1x1x32xf32> to vector<1x32x32xf32>
    %28 = arith.mulf %1, %27 : vector<1x32x32xf32>
    %29 = arith.mulf %20, %1 : vector<1x32x32xf32>
    %30 = arith.subf %28, %29 : vector<1x32x32xf32>
    %31 = arith.mulf %26, %26 : vector<1x32x32xf32>
    %32 = arith.mulf %30, %30 : vector<1x32x32xf32>
    %33 = arith.addf %31, %32 : vector<1x32x32xf32>
    %cst_10 = arith.constant dense<0.000000e+00> : vector<32x32xf32>
    %34 = vector.multi_reduction <add>, %33, %cst_10 [0] : vector<1x32x32xf32> to vector<32x32xf32>
    %cst_11 = arith.constant 0.000000e+00 : f32
    %35 = vector.broadcast %cst_11 : f32 to vector<32x32xf32>
    %cst_12 = arith.constant 0.000000e+00 : f32
    %36 = vector.broadcast %cst_12 : f32 to vector<32x32xf32>
    %cst_13 = arith.constant 0.000000e+00 : f32
    %37 = vector.broadcast %cst_13 : f32 to vector<32x32xf32>
    %38 = vector.shape_cast %0 : vector<1x32x32xf32> to vector<32x32xf32>
    %39 = vector.shape_cast %1 : vector<1x32x32xf32> to vector<32x32xf32>
    %cst_14 = arith.constant dense<0.000000e+00> : vector<32x32xf32>
    %40 = tpu.matmul %38, %39, %cst_14 {dimension_numbers = #tpu.dot_dimension_numbers<[1], [0], [0], [1], [0, 0, 1, 1], [], []>} : vector<32x32xf32>, vector<32x32xf32>, vector<32x32xf32> -> vector<32x32xf32>
    %41 = arith.subf %40, %9 : vector<32x32xf32>
    %42 = arith.mulf %41, %41 : vector<32x32xf32>
    %43 = arith.addf %35, %42 : vector<32x32xf32>
    %cst_15 = arith.constant dense<0.000000e+00> : vector<32x32xf32>
    %44 = tpu.matmul %39, %38, %cst_15 {dimension_numbers = #tpu.dot_dimension_numbers<[1], [0], [0], [1], [0, 0, 1, 1], [], []>} : vector<32x32xf32>, vector<32x32xf32>, vector<32x32xf32> -> vector<32x32xf32>
    %45 = arith.subf %44, %9 : vector<32x32xf32>
    %46 = arith.mulf %45, %45 : vector<32x32xf32>
    %47 = arith.addf %43, %46 : vector<32x32xf32>
    %cst_16 = arith.constant dense<0.000000e+00> : vector<32x32xf32>
    %48 = tpu.matmul %38, %38, %cst_16 {dimension_numbers = #tpu.dot_dimension_numbers<[0], [0], [1], [1], [0, 1, 1, 1], [], []>} : vector<32x32xf32>, vector<32x32xf32>, vector<32x32xf32> -> vector<32x32xf32>
    %49 = arith.subf %48, %9 : vector<32x32xf32>
    %50 = arith.mulf %49, %49 : vector<32x32xf32>
    %51 = arith.addf %36, %50 : vector<32x32xf32>
    %cst_17 = arith.constant dense<0.000000e+00> : vector<32x32xf32>
    %52 = tpu.matmul %39, %39, %cst_17 {dimension_numbers = #tpu.dot_dimension_numbers<[0], [0], [1], [1], [0, 1, 1, 1], [], []>} : vector<32x32xf32>, vector<32x32xf32>, vector<32x32xf32> -> vector<32x32xf32>
    %53 = arith.subf %52, %9 : vector<32x32xf32>
    %54 = arith.mulf %53, %53 : vector<32x32xf32>
    %55 = arith.addf %51, %54 : vector<32x32xf32>
    %56 = arith.truncf %38 : vector<32x32xf32> to vector<32x32xbf16>
    %57 = arith.truncf %39 : vector<32x32xf32> to vector<32x32xbf16>
    %c0_18 = arith.constant 0 : index
    %c0_19 = arith.constant 0 : index
    %c0_20 = arith.constant 0 : index
    %58 = vector.load %arg3[%c0_18, %c0_19, %c0_20] : memref<1x128x32xbf16, #tpu.memory_space<vmem>>, vector<1x128x32xbf16>
    %59 = vector.shape_cast %58 : vector<1x128x32xbf16> to vector<128x32xbf16>
    %c0_21 = arith.constant 0 : index
    %c0_22 = arith.constant 0 : index
    %c0_23 = arith.constant 0 : index
    %60 = vector.load %arg4[%c0_21, %c0_22, %c0_23] : memref<1x128x32xbf16, #tpu.memory_space<vmem>>, vector<1x128x32xbf16>
    %61 = vector.shape_cast %60 : vector<1x128x32xbf16> to vector<128x32xbf16>
    %c0_24 = arith.constant 0 : index
    %c0_25 = arith.constant 0 : index
    %c0_26 = arith.constant 0 : index
    %62 = vector.load %arg5[%c0_24, %c0_25, %c0_26] : memref<1x32x128xbf16, #tpu.memory_space<vmem>>, vector<1x32x128xbf16>
    %63 = vector.shape_cast %62 : vector<1x32x128xbf16> to vector<32x128xbf16>
    %c0_27 = arith.constant 0 : index
    %c0_28 = arith.constant 0 : index
    %c0_29 = arith.constant 0 : index
    %64 = vector.load %arg6[%c0_27, %c0_28, %c0_29] : memref<1x32x128xbf16, #tpu.memory_space<vmem>>, vector<1x32x128xbf16>
    %65 = vector.shape_cast %64 : vector<1x32x128xbf16> to vector<32x128xbf16>
    %c0_30 = arith.constant 0 : index
    %c0_31 = arith.constant 0 : index
    %c0_32 = arith.constant 0 : index
    %66 = vector.load %arg7[%c0_30, %c0_31, %c0_32] : memref<1x6x128xbf16, #tpu.memory_space<vmem>>, vector<1x6x128xbf16>
    %67 = vector.shape_cast %66 : vector<1x6x128xbf16> to vector<6x128xbf16>
    %c0_33 = arith.constant 0 : index
    %c0_34 = arith.constant 0 : index
    %c0_35 = arith.constant 0 : index
    %68 = vector.load %arg8[%c0_33, %c0_34, %c0_35] : memref<1x6x128xbf16, #tpu.memory_space<vmem>>, vector<1x6x128xbf16>
    %69 = vector.shape_cast %68 : vector<1x6x128xbf16> to vector<6x128xbf16>
    %cst_36 = arith.constant dense<0.000000e+00> : vector<32x128xf32>
    %70 = tpu.matmul %56, %63, %cst_36 {dimension_numbers = #tpu.dot_dimension_numbers<[1], [0], [0], [1], [0, 0, 1, 1], [], []>} : vector<32x32xbf16>, vector<32x128xbf16>, vector<32x128xf32> -> vector<32x128xf32>
    %71 = arith.truncf %70 : vector<32x128xf32> to vector<32x128xbf16>
    %cst_37 = arith.constant dense<0.000000e+00> : vector<32x128xf32>
    %72 = tpu.matmul %57, %65, %cst_37 {dimension_numbers = #tpu.dot_dimension_numbers<[1], [0], [0], [1], [0, 0, 1, 1], [], []>} : vector<32x32xbf16>, vector<32x128xbf16>, vector<32x128xf32> -> vector<32x128xf32>
    %73 = arith.truncf %72 : vector<32x128xf32> to vector<32x128xbf16>
    %cst_38 = arith.constant dense<0.000000e+00> : vector<128x32xf32>
    %74 = tpu.matmul %61, %56, %cst_38 {dimension_numbers = #tpu.dot_dimension_numbers<[1], [0], [0], [1], [0, 0, 1, 1], [], []>} : vector<128x32xbf16>, vector<32x32xbf16>, vector<128x32xf32> -> vector<128x32xf32>
    %75 = arith.truncf %74 : vector<128x32xf32> to vector<128x32xbf16>
    %cst_39 = arith.constant dense<0.000000e+00> : vector<128x32xf32>
    %76 = tpu.matmul %59, %57, %cst_39 {dimension_numbers = #tpu.dot_dimension_numbers<[1], [0], [0], [1], [0, 0, 1, 1], [], []>} : vector<128x32xbf16>, vector<32x32xbf16>, vector<128x32xf32> -> vector<128x32xf32>
    %77 = arith.truncf %76 : vector<128x32xf32> to vector<128x32xbf16>
    %78 = tpu.concatenate %67, %69 in 1 : vector<6x128xbf16>, vector<6x128xbf16> -> vector<6x256xbf16>
    %79 = tpu.concatenate %69, %67 in 1 : vector<6x128xbf16>, vector<6x128xbf16> -> vector<6x256xbf16>
    %cst_40 = arith.constant 0.000000e+00 : bf16
    %80 = vector.broadcast %cst_40 : bf16 to vector<32x128xbf16>
    %81 = arith.subf %80, %65 : vector<32x128xbf16>
    %82 = tpu.concatenate %71, %81 in 1 : vector<32x128xbf16>, vector<32x128xbf16> -> vector<32x256xbf16>
    %cst_41 = arith.constant 0.000000e+00 : bf16
    %83 = vector.broadcast %cst_41 : bf16 to vector<32x128xbf16>
    %84 = arith.subf %83, %63 : vector<32x128xbf16>
    %85 = tpu.concatenate %73, %84 in 1 : vector<32x128xbf16>, vector<32x128xbf16> -> vector<32x256xbf16>
    %86 = vector.shape_cast %78 : vector<6x256xbf16> to vector<6x1x256xbf16>
    %87 = vector.shape_cast %82 : vector<32x256xbf16> to vector<1x32x256xbf16>
    %88 = vector.broadcast %86 : vector<6x1x256xbf16> to vector<6x32x256xbf16>
    %89 = vector.broadcast %87 : vector<1x32x256xbf16> to vector<6x32x256xbf16>
    %90 = arith.mulf %88, %89 : vector<6x32x256xbf16>
    %91 = vector.shape_cast %90 : vector<6x32x256xbf16> to vector<192x256xbf16>
    %92 = vector.shape_cast %79 : vector<6x256xbf16> to vector<6x1x256xbf16>
    %93 = vector.shape_cast %85 : vector<32x256xbf16> to vector<1x32x256xbf16>
    %94 = vector.broadcast %92 : vector<6x1x256xbf16> to vector<6x32x256xbf16>
    %95 = vector.broadcast %93 : vector<1x32x256xbf16> to vector<6x32x256xbf16>
    %96 = arith.mulf %94, %95 : vector<6x32x256xbf16>
    %97 = vector.shape_cast %96 : vector<6x32x256xbf16> to vector<192x256xbf16>
    %98 = tpu.concatenate %59, %75 in 0 : vector<128x32xbf16>, vector<128x32xbf16> -> vector<256x32xbf16>
    %99 = tpu.concatenate %61, %77 in 0 : vector<128x32xbf16>, vector<128x32xbf16> -> vector<256x32xbf16>
    %cst_42 = arith.constant dense<0.000000e+00> : vector<192x32xf32>
    %100 = tpu.matmul %91, %98, %cst_42 {dimension_numbers = #tpu.dot_dimension_numbers<[1], [0], [0], [1], [0, 0, 1, 1], [], []>} : vector<192x256xbf16>, vector<256x32xbf16>, vector<192x32xf32> -> vector<192x32xf32>
    %cst_43 = arith.constant dense<0.000000e+00> : vector<192x32xf32>
    %101 = tpu.matmul %97, %99, %cst_43 {dimension_numbers = #tpu.dot_dimension_numbers<[1], [0], [0], [1], [0, 0, 1, 1], [], []>} : vector<192x256xbf16>, vector<256x32xbf16>, vector<192x32xf32> -> vector<192x32xf32>
    %102 = arith.mulf %100, %100 : vector<192x32xf32>
    %103 = arith.mulf %101, %101 : vector<192x32xf32>
    %104 = arith.addf %102, %103 : vector<192x32xf32>
    %105 = vector.shape_cast %104 : vector<192x32xf32> to vector<6x32x32xf32>
    %cst_44 = arith.constant dense<0.000000e+00> : vector<32x32xf32>
    %106 = vector.multi_reduction <add>, %105, %cst_44 [0] : vector<6x32x32xf32> to vector<32x32xf32>
    %107 = arith.addf %37, %106 : vector<32x32xf32>
    %108 = vector.shape_cast %47 : vector<32x32xf32> to vector<1x32x32xf32>
    %cst_45 = arith.constant dense<0.000000e+00> : vector<1xf32>
    %109 = vector.multi_reduction <add>, %108, %cst_45 [1, 2] : vector<1x32x32xf32> to vector<1xf32>
    %110 = vector.shape_cast %109 : vector<1xf32> to vector<1x1x1xf32>
    %111 = vector.extract %110[0, 0, 0] : f32 from vector<1x1x1xf32>
    %112 = vector.broadcast %111 : f32 to vector<1x1xf32>
    %113 = vector.shape_cast %55 : vector<32x32xf32> to vector<1x32x32xf32>
    %cst_46 = arith.constant dense<0.000000e+00> : vector<1xf32>
    %114 = vector.multi_reduction <add>, %113, %cst_46 [1, 2] : vector<1x32x32xf32> to vector<1xf32>
    %115 = vector.shape_cast %114 : vector<1xf32> to vector<1x1x1xf32>
    %116 = vector.extract %115[0, 0, 0] : f32 from vector<1x1x1xf32>
    %117 = vector.broadcast %116 : f32 to vector<1x1xf32>
    %118 = vector.shape_cast %34 : vector<32x32xf32> to vector<1x32x32xf32>
    %cst_47 = arith.constant dense<0.000000e+00> : vector<1xf32>
    %119 = vector.multi_reduction <add>, %118, %cst_47 [1, 2] : vector<1x32x32xf32> to vector<1xf32>
    %120 = vector.shape_cast %119 : vector<1xf32> to vector<1x1x1xf32>
    %121 = vector.extract %120[0, 0, 0] : f32 from vector<1x1x1xf32>
    %122 = vector.broadcast %121 : f32 to vector<1x1xf32>
    %123 = vector.shape_cast %107 : vector<32x32xf32> to vector<1x32x32xf32>
    %cst_48 = arith.constant dense<0.000000e+00> : vector<1xf32>
    %124 = vector.multi_reduction <add>, %123, %cst_48 [1, 2] : vector<1x32x32xf32> to vector<1xf32>
    %125 = vector.shape_cast %124 : vector<1xf32> to vector<1x1x1xf32>
    %126 = vector.extract %125[0, 0, 0] : f32 from vector<1x1x1xf32>
    %127 = vector.broadcast %126 : f32 to vector<1x1xf32>
    %128 = tpu.iota {dimensions = array<i32: 1>} : vector<1x128xi32>
    %cst_49 = arith.constant 0.000000e+00 : f32
    %129 = vector.broadcast %cst_49 : f32 to vector<1x128xf32>
    %c0_i32 = arith.constant 0 : i32
    %130 = vector.broadcast %c0_i32 : i32 to vector<1x128xi32>
    %131 = arith.cmpi eq, %128, %130 : vector<1x128xi32>
    %132 = vector.shape_cast %112 : vector<1x1xf32> to vector<1x1xf32>
    %133 = vector.broadcast %132 : vector<1x1xf32> to vector<1x128xf32>
    %134 = arith.select %131, %133, %129 : vector<1x128xi1>, vector<1x128xf32>
    %c1_i32 = arith.constant 1 : i32
    %135 = vector.broadcast %c1_i32 : i32 to vector<1x128xi32>
    %136 = arith.cmpi eq, %128, %135 : vector<1x128xi32>
    %137 = vector.shape_cast %117 : vector<1x1xf32> to vector<1x1xf32>
    %138 = vector.broadcast %137 : vector<1x1xf32> to vector<1x128xf32>
    %139 = arith.select %136, %138, %129 : vector<1x128xi1>, vector<1x128xf32>
    %140 = arith.addf %134, %139 : vector<1x128xf32>
    %c2_i32 = arith.constant 2 : i32
    %141 = vector.broadcast %c2_i32 : i32 to vector<1x128xi32>
    %142 = arith.cmpi eq, %128, %141 : vector<1x128xi32>
    %143 = vector.shape_cast %122 : vector<1x1xf32> to vector<1x1xf32>
    %144 = vector.broadcast %143 : vector<1x1xf32> to vector<1x128xf32>
    %145 = arith.select %142, %144, %129 : vector<1x128xi1>, vector<1x128xf32>
    %146 = arith.addf %140, %145 : vector<1x128xf32>
    %c3_i32 = arith.constant 3 : i32
    %147 = vector.broadcast %c3_i32 : i32 to vector<1x128xi32>
    %148 = arith.cmpi eq, %128, %147 : vector<1x128xi32>
    %149 = vector.shape_cast %127 : vector<1x1xf32> to vector<1x1xf32>
    %150 = vector.broadcast %149 : vector<1x1xf32> to vector<1x128xf32>
    %151 = arith.select %148, %150, %129 : vector<1x128xi1>, vector<1x128xf32>
    %152 = arith.addf %146, %151 : vector<1x128xf32>
    %c0_50 = arith.constant 0 : index
    %c0_51 = arith.constant 0 : index
    %c0_52 = arith.constant 0 : index
    %153 = vector.load %arg10[%c0_50, %c0_51, %c0_52] : memref<1x1x128xf32, #tpu.memory_space<vmem>>, vector<1x1x128xf32>
    %154 = vector.shape_cast %153 : vector<1x1x128xf32> to vector<1x128xf32>
    %155 = vector.shape_cast %152 : vector<1x128xf32> to vector<1x1x128xf32>
    tpu.vector_store %arg10[%c0_50, %c0_51, %c0_52], %155 {strides = array<i32>} : memref<1x1x128xf32, #tpu.memory_space<vmem>>, vector<1x1x128xf32>,
    return
  }
  func.func @transform_0(%arg0: i32) -> (i32, i32, i32) {
    %c0_i32 = arith.constant 0 : i32
    %c0_i32_0 = arith.constant 0 : i32
    %c0_i32_1 = arith.constant 0 : i32
    return %arg0, %c0_i32, %c0_i32_0 : i32, i32, i32
  }
  func.func @transform_1(%arg0: i32) -> (i32, i32, i32) {
    %c0_i32 = arith.constant 0 : i32
    %c0_i32_0 = arith.constant 0 : i32
    %c0_i32_1 = arith.constant 0 : i32
    return %arg0, %c0_i32, %c0_i32_0 : i32, i32, i32
  }
  func.func @transform_2(%arg0: i32) -> (i32, i32, i32) {
    %c0_i32 = arith.constant 0 : i32
    %c0_i32_0 = arith.constant 0 : i32
    %c0_i32_1 = arith.constant 0 : i32
    return %arg0, %c0_i32, %c0_i32_0 : i32, i32, i32
  }
  func.func @transform_3(%arg0: i32) -> (i32, i32, i32) {
    %c0_i32 = arith.constant 0 : i32
    %c0_i32_0 = arith.constant 0 : i32
    %c0_i32_1 = arith.constant 0 : i32
    return %arg0, %c0_i32, %c0_i32_0 : i32, i32, i32
  }
  func.func @transform_4(%arg0: i32) -> (i32, i32, i32) {
    %c0_i32 = arith.constant 0 : i32
    %c0_i32_0 = arith.constant 0 : i32
    %c0_i32_1 = arith.constant 0 : i32
    return %arg0, %c0_i32, %c0_i32_0 : i32, i32, i32
  }
  func.func @transform_5(%arg0: i32) -> (i32, i32, i32) {
    %c0_i32 = arith.constant 0 : i32
    %c0_i32_0 = arith.constant 0 : i32
    %c0_i32_1 = arith.constant 0 : i32
    return %arg0, %c0_i32, %c0_i32_0 : i32, i32, i32
  }
  func.func @transform_6(%arg0: i32) -> (i32, i32, i32) {
    %c0_i32 = arith.constant 0 : i32
    %c0_i32_0 = arith.constant 0 : i32
    %c0_i32_1 = arith.constant 0 : i32
    return %arg0, %c0_i32, %c0_i32_0 : i32, i32, i32
  }
  func.func @transform_7(%arg0: i32) -> (i32, i32, i32) {
    %c0_i32 = arith.constant 0 : i32
    %c0_i32_0 = arith.constant 0 : i32
    %c0_i32_1 = arith.constant 0 : i32
    return %arg0, %c0_i32, %c0_i32_0 : i32, i32, i32
  }
  func.func @transform_8(%arg0: i32) -> (i32, i32, i32) {
    %c0_i32 = arith.constant 0 : i32
    %c0_i32_0 = arith.constant 0 : i32
    %c0_i32_1 = arith.constant 0 : i32
    return %arg0, %c0_i32, %c0_i32_0 : i32, i32, i32
  }
  func.func @transform_9(%arg0: i32) -> (i32, i32, i32) {
    %c0_i32 = arith.constant 0 : i32
    %c0_i32_0 = arith.constant 0 : i32
    %c0_i32_1 = arith.constant 0 : i32
    return %arg0, %c0_i32, %c0_i32_0 : i32, i32, i32
  }
}

</mosaic_0001>

<llo_original>
// kernel: tpu_custom_call.1
$region0: #{tpu_custom_call.1}
  #allocation0 [shape = 'u32[]', space=smem, size = 0x4, offset = 0x4, fixed_abs, tag = 'smem constant byte address 0x4 - core index']
  #allocation1 [shape = 'u32[144,128]{1,0:T(1,128)}', space=vmem, size = 0x12000, scoped, tag = 'internal scratch']
  %s0 = inlined_call_operand.vmem [shape: f32[2,32,32], index: 0, kind: input, shape index: {}]
  %s1 = inlined_call_operand.vmem [shape: f32[2,32,32], index: 1, kind: input, shape index: {}]
  %s2 = inlined_call_operand.vmem [shape: bf16[2,128,32], index: 2, kind: input, shape index: {}]
  %s3 = inlined_call_operand.vmem [shape: bf16[2,128,32], index: 3, kind: input, shape index: {}]
  %s4 = inlined_call_operand.vmem [shape: bf16[2,32,128], index: 4, kind: input, shape index: {}]
  %s5 = inlined_call_operand.vmem [shape: bf16[2,32,128], index: 5, kind: input, shape index: {}]
  %s6 = inlined_call_operand.vmem [shape: bf16[2,6,128], index: 6, kind: input, shape index: {}]
  %s7 = inlined_call_operand.vmem [shape: bf16[2,6,128], index: 7, kind: input, shape index: {}]
  %s8 = inlined_call_operand.vmem [shape: f32[2,2,32], index: 8, kind: input, shape index: {}]
  %s9 = inlined_call_operand.hbm [shape: f32[2,1,128], index: 9, kind: output, shape index: {}]
  %s10 = sld [smem:[#allocation0]]
  $region69: #{tpu_custom_call.1} parent=0
    _
  %s12 = ssub.s32 1, %s10
  %s13 = scalar_select 0, %s12, %s10
  $region1: #{tpu_custom_call.1} parent=0
    #allocation2 [shape = 'u8[1024]{0}', space=vmem, size = 0x400, scoped, tag = 'output window, operand 0']
    #allocation3 [shape = 's32[2]{0}', space=sflag, size = 0x8, scoped, tag = 'scoped memory for tpu_custom_call.1']
    %14 = vsyncpa [#allocation3], 0
    %s15 = scalar_lea.sflag [#allocation3], 1
    %16 = vsyncpa %s15, 0
    loop: start=0, step=1, limit=4
    $region2: #{tpu_custom_call.1} parent=1 // loop_pre_header
      _
    $region3: #{tpu_custom_call.1} parent=1 // loop_header
      %s18 = sphi 0, %s22
      %p19 = scmp.ge.s32.totalorder %s18, 4
      %s28 = sphi 0, %s30
      %s31 = sphi 0, %s28
      %s32 = sphi 0, %s31
      %s48 = sphi 0, %s32
      %s54 = sphi 0, %s56
      %s57 = sphi 0, %s54
      %s58 = sphi 0, %s57
      %s74 = sphi 0, %s58
      %s80 = sphi 0, %s82
      %s83 = sphi 0, %s80
      %s84 = sphi 0, %s83
      %s100 = sphi 0, %s84
      %s106 = sphi 0, %s108
      %s109 = sphi 0, %s106
      %s110 = sphi 0, %s109
      %s126 = sphi 0, %s110
      %s132 = sphi 0, %s134
      %s135 = sphi 0, %s132
      %s136 = sphi 0, %s135
      %s152 = sphi 0, %s136
      %s158 = sphi 0, %s160
      %s161 = sphi 0, %s158
      %s162 = sphi 0, %s161
      %s178 = sphi 0, %s162
      %s184 = sphi 0, %s186
      %s187 = sphi 0, %s184
      %s188 = sphi 0, %s187
      %s204 = sphi 0, %s188
      %s210 = sphi 0, %s212
      %s213 = sphi 0, %s210
      %s214 = sphi 0, %s213
      %s230 = sphi 0, %s214
      %s236 = sphi 0, %s238
      %s239 = sphi 0, %s236
      %s240 = sphi 0, %s239
      %s256 = sphi 0, %s240
      %s262 = sphi 0, %s264
      %s265 = sphi 0, %s262
      %s266 = sphi 0, %s265
      %s282 = sphi 0, %s266
    $region4: #{tpu_custom_call.1} parent=1 // loop_header_branch
      %21 = sbr.rel (%p19) target = $region8
    $region5: #{tpu_custom_call.1} parent=1 // loop_body
      %s23 = ssub.s32 %s18, 1
      %s24 = ssub.s32 %s18, 2
      %s25 = sadd.s32 %s18, 1
      %s26 = ssub.s32 %s18, %s25
      %p27 = scmp.eq.s32.totalorder %s26, 0
      %s29 = sadd.s32 %s28, 1
      %s30 = scalar_select %p27, %s28, %s29
      %p33 = pneg %p27
      %p34 = scmp.eq.s32.totalorder %s18, 1
      %p35 = por %p33, %p34
      %p36 = scmp.ne.s32.totalorder %s28, %s31
      %p37 = scmp.eq.s32.totalorder %s18, 0
      %p38 = por %p36, %p37
      %p39 = scmp.ne.s32.totalorder %s28, %s31
      %p40 = scmp.eq.s32.totalorder %s23, 1
      %p41 = por %p39, %p40
      %p42 = scmp.ne.s32.totalorder %s31, %s32
      %p43 = scmp.eq.s32.totalorder %s23, 0
      %p44 = por %p42, %p43
      %p45 = scmp.ne.s32.totalorder %s31, %s32
      %p46 = scmp.eq.s32.totalorder %s24, 1
      %p47 = por %p45, %p46
      %p49 = scmp.ne.s32.totalorder %s32, %s48
      %p50 = scmp.eq.s32.totalorder %s24, 0
      %p51 = por %p49, %p50
      %s52 = ssub.s32 %s18, %s25
      %p53 = scmp.eq.s32.totalorder %s52, 0
      %s55 = sadd.s32 %s54, 1
      %s56 = scalar_select %p53, %s54, %s55
      %p59 = pneg %p53
      %p60 = scmp.eq.s32.totalorder %s18, 1
      %p61 = por %p59, %p60
      %p62 = scmp.ne.s32.totalorder %s54, %s57
      %p63 = scmp.eq.s32.totalorder %s18, 0
      %p64 = por %p62, %p63
      %p65 = scmp.ne.s32.totalorder %s54, %s57
      %p66 = scmp.eq.s32.totalorder %s23, 1
      %p67 = por %p65, %p66
      %p68 = scmp.ne.s32.totalorder %s57, %s58
      %p69 = scmp.eq.s32.totalorder %s23, 0
      %p70 = por %p68, %p69
      %p71 = scmp.ne.s32.totalorder %s57, %s58
      %p72 = scmp.eq.s32.totalorder %s24, 1
      %p73 = por %p71, %p72
      %p75 = scmp.ne.s32.totalorder %s58, %s74
      %p76 = scmp.eq.s32.totalorder %s24, 0
      %p77 = por %p75, %p76
      %s78 = ssub.s32 %s18, %s25
      %p79 = scmp.eq.s32.totalorder %s78, 0
      %s81 = sadd.s32 %s80, 1
      %s82 = scalar_select %p79, %s80, %s81
      %p85 = pneg %p79
      %p86 = scmp.eq.s32.totalorder %s18, 1
      %p87 = por %p85, %p86
      %p88 = scmp.ne.s32.totalorder %s80, %s83
      %p89 = scmp.eq.s32.totalorder %s18, 0
      %p90 = por %p88, %p89
      %p91 = scmp.ne.s32.totalorder %s80, %s83
      %p92 = scmp.eq.s32.totalorder %s23, 1
      %p93 = por %p91, %p92
      %p94 = scmp.ne.s32.totalorder %s83, %s84
      %p95 = scmp.eq.s32.totalorder %s23, 0
      %p96 = por %p94, %p95
      %p97 = scmp.ne.s32.totalorder %s83, %s84
      %p98 = scmp.eq.s32.totalorder %s24, 1
      %p99 = por %p97, %p98
      %p101 = scmp.ne.s32.totalorder %s84, %s100
      %p102 = scmp.eq.s32.totalorder %s24, 0
      %p103 = por %p101, %p102
      %s104 = ssub.s32 %s18, %s25
      %p105 = scmp.eq.s32.totalorder %s104, 0
      %s107 = sadd.s32 %s106, 1
      %s108 = scalar_select %p105, %s106, %s107
      %p111 = pneg %p105
      %p112 = scmp.eq.s32.totalorder %s18, 1
      %p113 = por %p111, %p112
      %p114 = scmp.ne.s32.totalorder %s106, %s109
      %p115 = scmp.eq.s32.totalorder %s18, 0
      %p116 = por %p114, %p115
      %p117 = scmp.ne.s32.totalorder %s106, %s109
      %p118 = scmp.eq.s32.totalorder %s23, 1
      %p119 = por %p117, %p118
      %p120 = scmp.ne.s32.totalorder %s109, %s110
      %p121 = scmp.eq.s32.totalorder %s23, 0
      %p122 = por %p120, %p121
      %p123 = scmp.ne.s32.totalorder %s109, %s110
      %p124 = scmp.eq.s32.totalorder %s24, 1
      %p125 = por %p123, %p124
      %p127 = scmp.ne.s32.totalorder %s110, %s126
      %p128 = scmp.eq.s32.totalorder %s24, 0
      %p129 = por %p127, %p128
      %s130 = ssub.s32 %s18, %s25
      %p131 = scmp.eq.s32.totalorder %s130, 0
      %s133 = sadd.s32 %s132, 1
      %s134 = scalar_select %p131, %s132, %s133
      %p137 = pneg %p131
      %p138 = scmp.eq.s32.totalorder %s18, 1
      %p139 = por %p137, %p138
      %p140 = scmp.ne.s32.totalorder %s132, %s135
      %p141 = scmp.eq.s32.totalorder %s18, 0
      %p142 = por %p140, %p141
      %p143 = scmp.ne.s32.totalorder %s132, %s135
      %p144 = scmp.eq.s32.totalorder %s23, 1
      %p145 = por %p143, %p144
      %p146 = scmp.ne.s32.totalorder %s135, %s136
      %p147 = scmp.eq.s32.totalorder %s23, 0
      %p148 = por %p146, %p147
      %p149 = scmp.ne.s32.totalorder %s135, %s136
      %p150 = scmp.eq.s32.totalorder %s24, 1
      %p151 = por %p149, %p150
      %p153 = scmp.ne.s32.totalorder %s136, %s152
      %p154 = scmp.eq.s32.totalorder %s24, 0
      %p155 = por %p153, %p154
      %s156 = ssub.s32 %s18, %s25
      %p157 = scmp.eq.s32.totalorder %s156, 0
      %s159 = sadd.s32 %s158, 1
      %s160 = scalar_select %p157, %s158, %s159
      %p163 = pneg %p157
      %p164 = scmp.eq.s32.totalorder %s18, 1
      %p165 = por %p163, %p164
      %p166 = scmp.ne.s32.totalorder %s158, %s161
      %p167 = scmp.eq.s32.totalorder %s18, 0
      %p168 = por %p166, %p167
      %p169 = scmp.ne.s32.totalorder %s158, %s161
      %p170 = scmp.eq.s32.totalorder %s23, 1
      %p171 = por %p169, %p170
      %p172 = scmp.ne.s32.totalorder %s161, %s162
      %p173 = scmp.eq.s32.totalorder %s23, 0
      %p174 = por %p172, %p173
      %p175 = scmp.ne.s32.totalorder %s161, %s162
      %p176 = scmp.eq.s32.totalorder %s24, 1
      %p177 = por %p175, %p176
      %p179 = scmp.ne.s32.totalorder %s162, %s178
      %p180 = scmp.eq.s32.totalorder %s24, 0
      %p181 = por %p179, %p180
      %s182 = ssub.s32 %s18, %s25
      %p183 = scmp.eq.s32.totalorder %s182, 0
      %s185 = sadd.s32 %s184, 1
      %s186 = scalar_select %p183, %s184, %s185
      %p189 = pneg %p183
      %p190 = scmp.eq.s32.totalorder %s18, 1
      %p191 = por %p189, %p190
      %p192 = scmp.ne.s32.totalorder %s184, %s187
      %p193 = scmp.eq.s32.totalorder %s18, 0
      %p194 = por %p192, %p193
      %p195 = scmp.ne.s32.totalorder %s184, %s187
      %p196 = scmp.eq.s32.totalorder %s23, 1
      %p197 = por %p195, %p196
      %p198 = scmp.ne.s32.totalorder %s187, %s188
      %p199 = scmp.eq.s32.totalorder %s23, 0
      %p200 = por %p198, %p199
      %p201 = scmp.ne.s32.totalorder %s187, %s188
      %p202 = scmp.eq.s32.totalorder %s24, 1
      %p203 = por %p201, %p202
      %p205 = scmp.ne.s32.totalorder %s188, %s204
      %p206 = scmp.eq.s32.totalorder %s24, 0
      %p207 = por %p205, %p206
      %s208 = ssub.s32 %s18, %s25
      %p209 = scmp.eq.s32.totalorder %s208, 0
      %s211 = sadd.s32 %s210, 1
      %s212 = scalar_select %p209, %s210, %s211
      %p215 = pneg %p209
      %p216 = scmp.eq.s32.totalorder %s18, 1
      %p217 = por %p215, %p216
      %p218 = scmp.ne.s32.totalorder %s210, %s213
      %p219 = scmp.eq.s32.totalorder %s18, 0
      %p220 = por %p218, %p219
      %p221 = scmp.ne.s32.totalorder %s210, %s213
      %p222 = scmp.eq.s32.totalorder %s23, 1
      %p223 = por %p221, %p222
      %p224 = scmp.ne.s32.totalorder %s213, %s214
      %p225 = scmp.eq.s32.totalorder %s23, 0
      %p226 = por %p224, %p225
      %p227 = scmp.ne.s32.totalorder %s213, %s214
      %p228 = scmp.eq.s32.totalorder %s24, 1
      %p229 = por %p227, %p228
      %p231 = scmp.ne.s32.totalorder %s214, %s230
      %p232 = scmp.eq.s32.totalorder %s24, 0
      %p233 = por %p231, %p232
      %s234 = ssub.s32 %s18, %s25
      %p235 = scmp.eq.s32.totalorder %s234, 0
      %s237 = sadd.s32 %s236, 1
      %s238 = scalar_select %p235, %s236, %s237
      %p241 = pneg %p235
      %p242 = scmp.eq.s32.totalorder %s18, 1
      %p243 = por %p241, %p242
      %p244 = scmp.ne.s32.totalorder %s236, %s239
      %p245 = scmp.eq.s32.totalorder %s18, 0
      %p246 = por %p244, %p245
      %p247 = scmp.ne.s32.totalorder %s236, %s239
      %p248 = scmp.eq.s32.totalorder %s23, 1
      %p249 = por %p247, %p248
      %p250 = scmp.ne.s32.totalorder %s239, %s240
      %p251 = scmp.eq.s32.totalorder %s23, 0
      %p252 = por %p250, %p251
      %p253 = scmp.ne.s32.totalorder %s239, %s240
      %p254 = scmp.eq.s32.totalorder %s24, 1
      %p255 = por %p253, %p254
      %p257 = scmp.ne.s32.totalorder %s240, %s256
      %p258 = scmp.eq.s32.totalorder %s24, 0
      %p259 = por %p257, %p258
      %s260 = ssub.s32 %s18, %s25
      %p261 = scmp.eq.s32.totalorder %s260, 0
      %s263 = sadd.s32 %s262, 1
      %s264 = scalar_select %p261, %s262, %s263
      %p267 = pneg %p261
      %p268 = scmp.eq.s32.totalorder %s18, 1
      %p269 = por %p267, %p268
      %p270 = scmp.ne.s32.totalorder %s262, %s265
      %p271 = scmp.eq.s32.totalorder %s18, 0
      %p272 = por %p270, %p271
      %p273 = scmp.ne.s32.totalorder %s262, %s265
      %p274 = scmp.eq.s32.totalorder %s23, 1
      %p275 = por %p273, %p274
      %p276 = scmp.ne.s32.totalorder %s265, %s266
      %p277 = scmp.eq.s32.totalorder %s23, 0
      %p278 = por %p276, %p277
      %p279 = scmp.ne.s32.totalorder %s265, %s266
      %p280 = scmp.eq.s32.totalorder %s24, 1
      %p281 = por %p279, %p280
      %p283 = scmp.ne.s32.totalorder %s266, %s282
      %p284 = scmp.eq.s32.totalorder %s24, 0
      %p285 = por %p283, %p284
      %p286 = scmp.le.s32.totalorder 1, %s18
      %p287 = scmp.lt.s32.totalorder %s18, 3
      %p288 = pnand %p286, %p287
      %p289 = pneg %p288
      // Predicated region
      $region9: #{tpu_custom_call.1} parent=5 // pred_check
        _
      $region10: #{tpu_custom_call.1} parent=5 // pred_check_branch
        %291 = sbr.rel (%p288) target = $region12
      $region11: #{tpu_custom_call.1} parent=5 // pred_region
        %s292 = ssub.s32 %s18, 1
      $region12: #{tpu_custom_call.1} parent=5 // pred_fallthru
        _
      %p293 = scmp.lt.s32.totalorder %s18, 2
      // Predicated region
      $region13: #{tpu_custom_call.1} parent=5 // pred_check
        %p294 = pneg %p293
      $region14: #{tpu_custom_call.1} parent=5 // pred_check_branch
        %296 = sbr.rel (%p294) target = $region16
      $region15: #{tpu_custom_call.1} parent=5 // pred_region
        // Predicated region
        $region17: #{tpu_custom_call.1} parent=15 // pred_check
          %p297 = pneg %p38
        $region18: #{tpu_custom_call.1} parent=15 // pred_check_branch
          %299 = sbr.rel (%p297) target = $region20
        $region19: #{tpu_custom_call.1} parent=15 // pred_region
          %p300 = scmp.lt.s32.totalorder %s18, 1
          %s301 = scalar_select %p300, %s18, 1
          %s302 = smul.addr %s301, 4
          %s303 = smul.addr %s302, 8
          %s304 = scalar_lea.vmem %s0, %s303
        $region20: #{tpu_custom_call.1} parent=15 // pred_fallthru
          _
        // Predicated region
        $region21: #{tpu_custom_call.1} parent=15 // pred_check
          %p305 = pneg %p64
        $region22: #{tpu_custom_call.1} parent=15 // pred_check_branch
          %307 = sbr.rel (%p305) target = $region24
        $region23: #{tpu_custom_call.1} parent=15 // pred_region
          %p308 = scmp.lt.s32.totalorder %s18, 1
          %s309 = scalar_select %p308, %s18, 1
          %s310 = smul.addr %s309, 4
          %s311 = smul.addr %s310, 8
          %s312 = scalar_lea.vmem %s1, %s311
        $region24: #{tpu_custom_call.1} parent=15 // pred_fallthru
          _
        // Predicated region
        $region25: #{tpu_custom_call.1} parent=15 // pred_check
          %p313 = pneg %p90
        $region26: #{tpu_custom_call.1} parent=15 // pred_check_branch
          %315 = sbr.rel (%p313) target = $region28
        $region27: #{tpu_custom_call.1} parent=15 // pred_region
          %p316 = scmp.lt.s32.totalorder %s18, 1
          %s317 = scalar_select %p316, %s18, 1
          %s318 = smul.addr %s317, 16
          %s319 = smul.addr %s318, 4
          %s320 = scalar_lea.vmem %s2, %s319
        $region28: #{tpu_custom_call.1} parent=15 // pred_fallthru
          _
        // Predicated region
        $region29: #{tpu_custom_call.1} parent=15 // pred_check
          %p321 = pneg %p116
        $region30: #{tpu_custom_call.1} parent=15 // pred_check_branch
          %323 = sbr.rel (%p321) target = $region32
        $region31: #{tpu_custom_call.1} parent=15 // pred_region
          %p324 = scmp.lt.s32.totalorder %s18, 1
          %s325 = scalar_select %p324, %s18, 1
          %s326 = smul.addr %s325, 16
          %s327 = smul.addr %s326, 4
          %s328 = scalar_lea.vmem %s3, %s327
        $region32: #{tpu_custom_call.1} parent=15 // pred_fallthru
          _
        // Predicated region
        $region33: #{tpu_custom_call.1} parent=15 // pred_check
          %p329 = pneg %p142
        $region34: #{tpu_custom_call.1} parent=15 // pred_check_branch
          %331 = sbr.rel (%p329) target = $region36
        $region35: #{tpu_custom_call.1} parent=15 // pred_region
          %p332 = scmp.lt.s32.totalorder %s18, 1
          %s333 = scalar_select %p332, %s18, 1
          %s334 = smul.addr %s333, 4
          %s335 = smul.addr %s334, 4
          %s336 = scalar_lea.vmem %s4, %s335
        $region36: #{tpu_custom_call.1} parent=15 // pred_fallthru
          _
        // Predicated region
        $region37: #{tpu_custom_call.1} parent=15 // pred_check
          %p337 = pneg %p168
        $region38: #{tpu_custom_call.1} parent=15 // pred_check_branch
          %339 = sbr.rel (%p337) target = $region40
        $region39: #{tpu_custom_call.1} parent=15 // pred_region
          %p340 = scmp.lt.s32.totalorder %s18, 1
          %s341 = scalar_select %p340, %s18, 1
          %s342 = smul.addr %s341, 4
          %s343 = smul.addr %s342, 4
          %s344 = scalar_lea.vmem %s5, %s343
        $region40: #{tpu_custom_call.1} parent=15 // pred_fallthru
          _
        // Predicated region
        $region41: #{tpu_custom_call.1} parent=15 // pred_check
          %p345 = pneg %p194
        $region42: #{tpu_custom_call.1} parent=15 // pred_check_branch
          %347 = sbr.rel (%p345) target = $region44
        $region43: #{tpu_custom_call.1} parent=15 // pred_region
          %p348 = scmp.lt.s32.totalorder %s18, 1
          %s349 = scalar_select %p348, %s18, 1
          %s350 = smul.addr %s349, 4
          %s351 = scalar_lea.vmem %s6, %s350
        $region44: #{tpu_custom_call.1} parent=15 // pred_fallthru
          _
        // Predicated region
        $region45: #{tpu_custom_call.1} parent=15 // pred_check
          %p352 = pneg %p220
        $region46: #{tpu_custom_call.1} parent=15 // pred_check_branch
          %354 = sbr.rel (%p352) target = $region48
        $region47: #{tpu_custom_call.1} parent=15 // pred_region
          %p355 = scmp.lt.s32.totalorder %s18, 1
          %s356 = scalar_select %p355, %s18, 1
          %s357 = smul.addr %s356, 4
          %s358 = scalar_lea.vmem %s7, %s357
        $region48: #{tpu_custom_call.1} parent=15 // pred_fallthru
          _
        // Predicated region
        $region49: #{tpu_custom_call.1} parent=15 // pred_check
          %p359 = pneg %p246
        $region50: #{tpu_custom_call.1} parent=15 // pred_check_branch
          %361 = sbr.rel (%p359) target = $region52
        $region51: #{tpu_custom_call.1} parent=15 // pred_region
          %p362 = scmp.lt.s32.totalorder %s18, 1
          %s363 = scalar_select %p362, %s18, 1
          %s364 = smul.addr %s363, 2
          %s365 = scalar_lea.vmem %s8, %s364
        $region52: #{tpu_custom_call.1} parent=15 // pred_fallthru
          _
      $region16: #{tpu_custom_call.1} parent=5 // pred_fallthru
        _
      %p366 = scmp.le.s32.totalorder 1, %s18
      %p367 = scmp.lt.s32.totalorder %s18, 3
      %p368 = pnand %p366, %p367
      %p369 = pneg %p368
      // Predicated region
      $region53: #{tpu_custom_call.1} parent=5 // pred_check
        _
      $region54: #{tpu_custom_call.1} parent=5 // pred_check_branch
        %371 = sbr.rel (%p368) target = $region56
      $region55: #{tpu_custom_call.1} parent=5 // pred_region
        %s372 = ssub.s32 %s18, 1
        %p373 = scmp.lt.s32.totalorder %s23, 1
        %s374 = scalar_select %p373, %s23, 1
        %s375 = smul.addr %s374, 4
        %s376 = smul.addr %s375, 8
        %s377 = scalar_lea.vmem %s0, %s376
        %p378 = pneg %p44
        %p379 = pneg %p41
        %p380 = scmp.lt.s32.totalorder %s23, 1
        %s381 = scalar_select %p380, %s23, 1
        %s382 = smul.addr %s381, 4
        %s383 = smul.addr %s382, 8
        %s384 = scalar_lea.vmem %s1, %s383
        %p385 = pneg %p70
        %p386 = pneg %p67
        %p387 = scmp.lt.s32.totalorder %s23, 1
        %s388 = scalar_select %p387, %s23, 1
        %s389 = smul.addr %s388, 16
        %s390 = smul.addr %s389, 4
        %s391 = scalar_lea.vmem %s2, %s390
        %p392 = pneg %p96
        %p393 = pneg %p93
        %p394 = scmp.lt.s32.totalorder %s23, 1
        %s395 = scalar_select %p394, %s23, 1
        %s396 = smul.addr %s395, 16
        %s397 = smul.addr %s396, 4
        %s398 = scalar_lea.vmem %s3, %s397
        %p399 = pneg %p122
        %p400 = pneg %p119
        %p401 = scmp.lt.s32.totalorder %s23, 1
        %s402 = scalar_select %p401, %s23, 1
        %s403 = smul.addr %s402, 4
        %s404 = smul.addr %s403, 4
        %s405 = scalar_lea.vmem %s4, %s404
        %p406 = pneg %p148
        %p407 = pneg %p145
        %p408 = scmp.lt.s32.totalorder %s23, 1
        %s409 = scalar_select %p408, %s23, 1
        %s410 = smul.addr %s409, 4
        %s411 = smul.addr %s410, 4
        %s412 = scalar_lea.vmem %s5, %s411
        %p413 = pneg %p174
        %p414 = pneg %p171
        %p415 = scmp.lt.s32.totalorder %s23, 1
        %s416 = scalar_select %p415, %s23, 1
        %s417 = smul.addr %s416, 4
        %s418 = scalar_lea.vmem %s6, %s417
        %p419 = pneg %p200
        %p420 = pneg %p197
        %p421 = scmp.lt.s32.totalorder %s23, 1
        %s422 = scalar_select %p421, %s23, 1
        %s423 = smul.addr %s422, 4
        %s424 = scalar_lea.vmem %s7, %s423
        %p425 = pneg %p226
        %p426 = pneg %p223
        %p427 = scmp.lt.s32.totalorder %s23, 1
        %s428 = scalar_select %p427, %s23, 1
        %s429 = smul.addr %s428, 2
        %s430 = scalar_lea.vmem %s8, %s429
        %p431 = pneg %p252
        %p432 = pneg %p249
        %p433 = pneg %p278
        %p434 = pneg %p275
        %s435 = sand.u32 %s265, 1
        %s436 = scalar_lea.sflag [#allocation3], %s435
        %s437 = sand.u32 %s265, 1
        %s438 = scalar_lea.vmem [#allocation2], %s437
        %p439 = scmp.lt.s32.totalorder %s23, 1
        %s440 = scalar_select %p439, %s23, 1
        %s441 = smul.addr %s440, 4
        %s442 = smul.addr %s441, 8
        %s443 = scalar_lea.vmem %s0, %s442
        %p444 = scmp.lt.s32.totalorder %s23, 1
        %s445 = scalar_select %p444, %s23, 1
        %s446 = smul.addr %s445, 4
        %s447 = smul.addr %s446, 8
        %s448 = scalar_lea.vmem %s1, %s447
        %p449 = scmp.lt.s32.totalorder %s23, 1
        %s450 = scalar_select %p449, %s23, 1
        %s451 = smul.addr %s450, 16
        %s452 = smul.addr %s451, 4
        %s453 = scalar_lea.vmem %s2, %s452
        %p454 = scmp.lt.s32.totalorder %s23, 1
        %s455 = scalar_select %p454, %s23, 1
        %s456 = smul.addr %s455, 16
        %s457 = smul.addr %s456, 4
        %s458 = scalar_lea.vmem %s3, %s457
        %p459 = scmp.lt.s32.totalorder %s23, 1
        %s460 = scalar_select %p459, %s23, 1
        %s461 = smul.addr %s460, 4
        %s462 = smul.addr %s461, 4
        %s463 = scalar_lea.vmem %s4, %s462
        %p464 = scmp.lt.s32.totalorder %s23, 1
        %s465 = scalar_select %p464, %s23, 1
        %s466 = smul.addr %s465, 4
        %s467 = smul.addr %s466, 4
        %s468 = scalar_lea.vmem %s5, %s467
        %p469 = scmp.lt.s32.totalorder %s23, 1
        %s470 = scalar_select %p469, %s23, 1
        %s471 = smul.addr %s470, 4
        %s472 = scalar_lea.vmem %s6, %s471
        %p473 = scmp.lt.s32.totalorder %s23, 1
        %s474 = scalar_select %p473, %s23, 1
        %s475 = smul.addr %s474, 4
        %s476 = scalar_lea.vmem %s7, %s475
        %p477 = scmp.lt.s32.totalorder %s23, 1
        %s478 = scalar_select %p477, %s23, 1
        %s479 = smul.addr %s478, 2
        %s480 = scalar_lea.vmem %s8, %s479
        %v482 = vld [vmem:[%s443] sm:$0xff]
        %v483 = vld [vmem:[%s443 + $0x8] sm:$0xff]
        %v484 = vld [vmem:[%s443 + $0x10] sm:$0xff]
        %v485 = vld [vmem:[%s443 + $0x18] sm:$0xff]
        %v486 = vld [vmem:[%s448] sm:$0xff]
        %v487 = vld [vmem:[%s448 + $0x8] sm:$0xff]
        %v488 = vld [vmem:[%s448 + $0x10] sm:$0xff]
        %v489 = vld [vmem:[%s448 + $0x18] sm:$0xff]
        %v490 = vld [vmem:[%s480] sm:$0x3]
        %v491 = vlaneseq
        %v492 = vshrl.u32 %v491, 7
        %v493 = vadd.s32 %v492, 8
        %v494 = vadd.s32 %v492, 16
        %v495 = vadd.s32 %v492, 24
        %v496 = vlaneseq
        %v497 = vand.u32 %v496, 127
        %vm498 = vcmp.eq.s32.totalorder %v492, %v497
        %vm499 = vcmp.eq.s32.totalorder %v493, %v497
        %vm500 = vcmp.eq.s32.totalorder %v494, %v497
        %vm501 = vcmp.eq.s32.totalorder %v495, %v497
        %v502 = vsel %vm498, 1, 0
        %v503 = vsel %vm499, 1, 0
        %v504 = vsel %vm500, 1, 0
        %v505 = vsel %vm501, 1, 0
        %v506 = vcvt.s32.f32 %v502
        %v507 = vcvt.s32.f32 %v503
        %v508 = vcvt.s32.f32 %v504
        %v509 = vcvt.s32.f32 %v505
        %v510 = vlaneseq
        %v511 = vshrl.u32 %v510, 7
        %v512 = vsub.s32 0, %v511
        %v513 = vrot.slane %v490, %v512
        %v514 = vmul.f32 %v506, %v513
        %v515 = vmul.f32 %v507, %v513
        %v516 = vmul.f32 %v508, %v513
        %v517 = vmul.f32 %v509, %v513
        %v518 = vlaneseq
        %v519 = vshrl.u32 %v518, 7
        %v520 = vsub.s32 1, %v519
        %v521 = vrot.slane %v490, %v520
        %v522 = vmul.f32 %v506, %v521
        %v523 = vmul.f32 %v507, %v521
        %v524 = vmul.f32 %v508, %v521
        %v525 = vmul.f32 %v509, %v521
        %vm526 = vcmask 261120
        %v528 = vsel %vm526, %v514, 0
        %v531 = vsel %vm526, %v515, 0
        %v534 = vsel %vm526, %v516, 0
        %v537 = vsel %vm526, %v517, 0
        %539 = vmatprep.subr.mxu0 0.0
        %540 = vmatpush1.msra.mxu0 1.0
        %541 = vmatprep.subr.mxu0 0.0
        %542 = vmatpush1.msra.mxu0 1.0
        %543 = vmatprep.subr.mxu0 0.0
        %544 = vmatpush1.msra.mxu0 1.0
        %545 = vmatprep.subr.mxu0 0.0
        %546 = vmatpush1.msra.mxu0 1.0
        %547 = vmatprep.subr.mxu0 0.0
        %548 = vmatpush1.msra.mxu0 0.0
        %549 = vmatprep.subr.mxu0 0.0
        %550 = vmatpush1.msra.mxu0 0.0
        %551 = vmatprep.subr.mxu0 0.0
        %552 = vmatpush1.msra.mxu0 0.0
        %553 = vmatprep.subr.mxu0 0.0
        %554 = vmatpush1.msra.mxu0 0.0
        %555 = vmatprep.subr.mxu0 0.0
        %556 = vmatpush1.msra.mxu0 0.0
        %557 = vmatprep.subr.mxu0 0.0
        %558 = vmatpush1.msra.mxu0 0.0
        %559 = vmatprep.subr.mxu0 0.0
        %560 = vmatpush1.msra.mxu0 0.0
        %561 = vmatprep.subr.mxu0 0.0
        %562 = vmatpush1.msra.mxu0 0.0
        %563 = vmatprep.subr.mxu0 0.0
        %564 = vmatpush1.msra.mxu0 0.0
        %565 = vmatprep.subr.mxu0 0.0
        %566 = vmatpush1.msra.mxu0 0.0
        %567 = vmatprep.subr.mxu0 0.0
        %568 = vmatpush1.msra.mxu0 0.0
        %569 = vmatprep.subr.mxu0 0.0
        %570 = vmatpush1.msra.mxu0 0.0
        %571 = vmatprep.subr.mxu0 0.0
        %572 = vmatpush1.msra.mxu0 0.0
        %573 = vmatprep.subr.mxu0 0.0
        %574 = vmatpush1.msra.mxu0 0.0
        %575 = vmatprep.subr.mxu0 0.0
        %576 = vmatpush1.msra.mxu0 0.0
        %577 = vmatprep.subr.mxu0 0.0
        %578 = vmatpush1.msra.mxu0 0.0
        %579 = vmatprep.subr.mxu0 0.0
        %580 = vmatpush1.msra.mxu0 0.0
        %581 = vmatprep.subr.mxu0 0.0
        %582 = vmatpush1.msra.mxu0 0.0
        %583 = vmatprep.subr.mxu0 0.0
        %584 = vmatpush1.msra.mxu0 0.0
        %585 = vmatprep.subr.mxu0 0.0
        %586 = vmatpush1.msra.mxu0 0.0
        %587 = vmatprep.subr.mxu0 0.0
        %588 = vmatpush1.msra.mxu0 0.0
        %589 = vmatprep.subr.mxu0 0.0
        %590 = vmatpush1.msra.mxu0 0.0
        %591 = vmatprep.subr.mxu0 0.0
        %592 = vmatpush1.msra.mxu0 0.0
        %593 = vmatprep.subr.mxu0 0.0
        %594 = vmatpush1.msra.mxu0 0.0
        %595 = vmatprep.subr.mxu0 0.0
        %596 = vmatpush1.msra.mxu0 0.0
        %597 = vmatprep.subr.mxu0 0.0
        %598 = vmatpush1.msra.mxu0 0.0
        %599 = vmatprep.subr.mxu0 0.0
        %600 = vmatpush1.msra.mxu0 0.0
        %601 = vmatprep.subr.mxu0 0.0
        %602 = vmatpush1.msra.mxu0 0.0
        %603 = vmatprep.mubr.f32.mxu0 0.0
        %604 = vmatmul.mubr.f32.gmra.mrb[0].mxu0 %v528
        %v605 = vpop.f32.mrb[0].mxu0
        %v606 = vadd.f32 0.0, %v605
        %v607 = vpop.f32.mrb[0].mxu0
        %608 = vmatprep.mubr.f32.mxu0 0.0
        %609 = vmatmul.mubr.f32.gmra.mrb[0].mxu0 %v531
        %v610 = vpop.f32.mrb[0].mxu0
        %v611 = vadd.f32 0.0, %v610
        %v612 = vpop.f32.mrb[0].mxu0
        %613 = vmatprep.mubr.f32.mxu0 0.0
        %614 = vmatmul.mubr.f32.gmra.mrb[0].mxu0 %v534
        %v615 = vpop.f32.mrb[0].mxu0
        %v616 = vadd.f32 0.0, %v615
        %v617 = vpop.f32.mrb[0].mxu0
        %618 = vmatprep.mubr.f32.mxu0 0.0
        %619 = vmatmul.mubr.f32.gmra.mrb[0].mxu0 %v537
        %v620 = vpop.f32.mrb[0].mxu0
        %v621 = vadd.f32 0.0, %v620
        %v622 = vpop.f32.mrb[0].mxu0
        %623 = vdwg.mxu0
        %v625 = vsel %vm526, %v522, 0
        %v628 = vsel %vm526, %v523, 0
        %v631 = vsel %vm526, %v524, 0
        %v634 = vsel %vm526, %v525, 0
        %636 = vmatprep.subr.mxu0 0.0
        %637 = vmatpush1.msra.mxu0 1.0
        %638 = vmatprep.subr.mxu0 0.0
        %639 = vmatpush1.msra.mxu0 1.0
        %640 = vmatprep.subr.mxu0 0.0
        %641 = vmatpush1.msra.mxu0 1.0
        %642 = vmatprep.subr.mxu0 0.0
        %643 = vmatpush1.msra.mxu0 1.0
        %644 = vmatprep.subr.mxu0 0.0
        %645 = vmatpush1.msra.mxu0 0.0
        %646 = vmatprep.subr.mxu0 0.0
        %647 = vmatpush1.msra.mxu0 0.0
        %648 = vmatprep.subr.mxu0 0.0
        %649 = vmatpush1.msra.mxu0 0.0
        %650 = vmatprep.subr.mxu0 0.0
        %651 = vmatpush1.msra.mxu0 0.0
        %652 = vmatprep.subr.mxu0 0.0
        %653 = vmatpush1.msra.mxu0 0.0
        %654 = vmatprep.subr.mxu0 0.0
        %655 = vmatpush1.msra.mxu0 0.0
        %656 = vmatprep.subr.mxu0 0.0
        %657 = vmatpush1.msra.mxu0 0.0
        %658 = vmatprep.subr.mxu0 0.0
        %659 = vmatpush1.msra.mxu0 0.0
        %660 = vmatprep.subr.mxu0 0.0
        %661 = vmatpush1.msra.mxu0 0.0
        %662 = vmatprep.subr.mxu0 0.0
        %663 = vmatpush1.msra.mxu0 0.0
        %664 = vmatprep.subr.mxu0 0.0
        %665 = vmatpush1.msra.mxu0 0.0
        %666 = vmatprep.subr.mxu0 0.0
        %667 = vmatpush1.msra.mxu0 0.0
        %668 = vmatprep.subr.mxu0 0.0
        %669 = vmatpush1.msra.mxu0 0.0
        %670 = vmatprep.subr.mxu0 0.0
        %671 = vmatpush1.msra.mxu0 0.0
        %672 = vmatprep.subr.mxu0 0.0
        %673 = vmatpush1.msra.mxu0 0.0
        %674 = vmatprep.subr.mxu0 0.0
        %675 = vmatpush1.msra.mxu0 0.0
        %676 = vmatprep.subr.mxu0 0.0
        %677 = vmatpush1.msra.mxu0 0.0
        %678 = vmatprep.subr.mxu0 0.0
        %679 = vmatpush1.msra.mxu0 0.0
        %680 = vmatprep.subr.mxu0 0.0
        %681 = vmatpush1.msra.mxu0 0.0
        %682 = vmatprep.subr.mxu0 0.0
        %683 = vmatpush1.msra.mxu0 0.0
        %684 = vmatprep.subr.mxu0 0.0
        %685 = vmatpush1.msra.mxu0 0.0
        %686 = vmatprep.subr.mxu0 0.0
        %687 = vmatpush1.msra.mxu0 0.0
        %688 = vmatprep.subr.mxu0 0.0
        %689 = vmatpush1.msra.mxu0 0.0
        %690 = vmatprep.subr.mxu0 0.0
        %691 = vmatpush1.msra.mxu0 0.0
        %692 = vmatprep.subr.mxu0 0.0
        %693 = vmatpush1.msra.mxu0 0.0
        %694 = vmatprep.subr.mxu0 0.0
        %695 = vmatpush1.msra.mxu0 0.0
        %696 = vmatprep.subr.mxu0 0.0
        %697 = vmatpush1.msra.mxu0 0.0
        %698 = vmatprep.subr.mxu0 0.0
        %699 = vmatpush1.msra.mxu0 0.0
        %700 = vmatprep.mubr.f32.mxu0 0.0
        %701 = vmatmul.mubr.f32.gmra.mrb[0].mxu0 %v625
        %v702 = vpop.f32.mrb[0].mxu0
        %v703 = vadd.f32 0.0, %v702
        %v704 = vpop.f32.mrb[0].mxu0
        %705 = vmatprep.mubr.f32.mxu0 0.0
        %706 = vmatmul.mubr.f32.gmra.mrb[0].mxu0 %v628
        %v707 = vpop.f32.mrb[0].mxu0
        %v708 = vadd.f32 0.0, %v707
        %v709 = vpop.f32.mrb[0].mxu0
        %710 = vmatprep.mubr.f32.mxu0 0.0
        %711 = vmatmul.mubr.f32.gmra.mrb[0].mxu0 %v631
        %v712 = vpop.f32.mrb[0].mxu0
        %v713 = vadd.f32 0.0, %v712
        %v714 = vpop.f32.mrb[0].mxu0
        %715 = vmatprep.mubr.f32.mxu0 0.0
        %716 = vmatmul.mubr.f32.gmra.mrb[0].mxu0 %v634
        %v717 = vpop.f32.mrb[0].mxu0
        %v718 = vadd.f32 0.0, %v717
        %v719 = vpop.f32.mrb[0].mxu0
        %720 = vdwg.mxu0
        %v721 = vmul.f32 %v482, %v513
        %v722 = vmul.f32 %v483, %v513
        %v723 = vmul.f32 %v484, %v513
        %v724 = vmul.f32 %v485, %v513
        %v725 = vmul.f32 %v703, %v482
        %v726 = vmul.f32 %v708, %v483
        %v727 = vmul.f32 %v713, %v484
        %v728 = vmul.f32 %v718, %v485
        %v729 = vsub.f32 %v721, %v725
        %v730 = vsub.f32 %v722, %v726
        %v731 = vsub.f32 %v723, %v727
        %v732 = vsub.f32 %v724, %v728
        %v733 = vmul.f32 %v486, %v521
        %v734 = vmul.f32 %v487, %v521
        %v735 = vmul.f32 %v488, %v521
        %v736 = vmul.f32 %v489, %v521
        %v737 = vmul.f32 %v606, %v486
        %v738 = vmul.f32 %v611, %v487
        %v739 = vmul.f32 %v616, %v488
        %v740 = vmul.f32 %v621, %v489
        %v741 = vsub.f32 %v733, %v737
        %v742 = vsub.f32 %v734, %v738
        %v743 = vsub.f32 %v735, %v739
        %v744 = vsub.f32 %v736, %v740
        %v745 = vmul.f32 %v729, %v729
        %v746 = vmul.f32 %v730, %v730
        %v747 = vmul.f32 %v731, %v731
        %v748 = vmul.f32 %v732, %v732
        %v749 = vmul.f32 %v741, %v741
        %v750 = vmul.f32 %v742, %v742
        %v751 = vmul.f32 %v743, %v743
        %v752 = vmul.f32 %v744, %v744
        %v753 = vadd.f32 %v745, %v749
        %v754 = vadd.f32 %v746, %v750
        %v755 = vadd.f32 %v747, %v751
        %v756 = vadd.f32 %v748, %v752
        %v757 = vadd.f32 %v753, 0.0
        %v758 = vadd.f32 %v754, 0.0
        %v759 = vadd.f32 %v755, 0.0
        %v760 = vadd.f32 %v756, 0.0
        %v762 = vsel %vm526, %v482, 0
        %v765 = vsel %vm526, %v483, 0
        %v768 = vsel %vm526, %v484, 0
        %v771 = vsel %vm526, %v485, 0
        %773 = vmatprep.subr.mxu0 0.0
        %774 = vmatpush1.msra.mxu0 %v486
        %775 = vmatprep.subr.mxu0 0.0
        %776 = vmatpush1.msra.mxu0 %v487
        %777 = vmatprep.subr.mxu0 0.0
        %778 = vmatpush1.msra.mxu0 %v488
        %779 = vmatprep.subr.mxu0 0.0
        %780 = vmatpush1.msra.mxu0 %v489
        %781 = vmatprep.subr.mxu0 0.0
        %782 = vmatpush1.msra.mxu0 0.0
        %783 = vmatprep.subr.mxu0 0.0
        %784 = vmatpush1.msra.mxu0 0.0
        %785 = vmatprep.subr.mxu0 0.0
        %786 = vmatpush1.msra.mxu0 0.0
        %787 = vmatprep.subr.mxu0 0.0
        %788 = vmatpush1.msra.mxu0 0.0
        %789 = vmatprep.subr.mxu0 0.0
        %790 = vmatpush1.msra.mxu0 0.0
        %791 = vmatprep.subr.mxu0 0.0
        %792 = vmatpush1.msra.mxu0 0.0
        %793 = vmatprep.subr.mxu0 0.0
        %794 = vmatpush1.msra.mxu0 0.0
        %795 = vmatprep.subr.mxu0 0.0
        %796 = vmatpush1.msra.mxu0 0.0
        %797 = vmatprep.subr.mxu0 0.0
        %798 = vmatpush1.msra.mxu0 0.0
        %799 = vmatprep.subr.mxu0 0.0
        %800 = vmatpush1.msra.mxu0 0.0
        %801 = vmatprep.subr.mxu0 0.0
        %802 = vmatpush1.msra.mxu0 0.0
        %803 = vmatprep.subr.mxu0 0.0
        %804 = vmatpush1.msra.mxu0 0.0
        %805 = vmatprep.subr.mxu0 0.0
        %806 = vmatpush1.msra.mxu0 0.0
        %807 = vmatprep.subr.mxu0 0.0
        %808 = vmatpush1.msra.mxu0 0.0
        %809 = vmatprep.subr.mxu0 0.0
        %810 = vmatpush1.msra.mxu0 0.0
        %811 = vmatprep.subr.mxu0 0.0
        %812 = vmatpush1.msra.mxu0 0.0
        %813 = vmatprep.subr.mxu0 0.0
        %814 = vmatpush1.msra.mxu0 0.0
        %815 = vmatprep.subr.mxu0 0.0
        %816 = vmatpush1.msra.mxu0 0.0
        %817 = vmatprep.subr.mxu0 0.0
        %818 = vmatpush1.msra.mxu0 0.0
        %819 = vmatprep.subr.mxu0 0.0
        %820 = vmatpush1.msra.mxu0 0.0
        %821 = vmatprep.subr.mxu0 0.0
        %822 = vmatpush1.msra.mxu0 0.0
        %823 = vmatprep.subr.mxu0 0.0
        %824 = vmatpush1.msra.mxu0 0.0
        %825 = vmatprep.subr.mxu0 0.0
        %826 = vmatpush1.msra.mxu0 0.0
        %827 = vmatprep.subr.mxu0 0.0
        %828 = vmatpush1.msra.mxu0 0.0
        %829 = vmatprep.subr.mxu0 0.0
        %830 = vmatpush1.msra.mxu0 0.0
        %831 = vmatprep.subr.mxu0 0.0
        %832 = vmatpush1.msra.mxu0 0.0
        %833 = vmatprep.subr.mxu0 0.0
        %834 = vmatpush1.msra.mxu0 0.0
        %835 = vmatprep.subr.mxu0 0.0
        %836 = vmatpush1.msra.mxu0 0.0
        %837 = vmatprep.mubr.f32.mxu0 0.0
        %838 = vmatmul.mubr.f32.gmra.mrb[0].mxu0 %v762
        %v839 = vpop.f32.mrb[0].mxu0
        %v840 = vadd.f32 0.0, %v839
        %v841 = vpop.f32.mrb[0].mxu0
        %842 = vmatprep.mubr.f32.mxu0 0.0
        %843 = vmatmul.mubr.f32.gmra.mrb[0].mxu0 %v765
        %v844 = vpop.f32.mrb[0].mxu0
        %v845 = vadd.f32 0.0, %v844
        %v846 = vpop.f32.mrb[0].mxu0
        %847 = vmatprep.mubr.f32.mxu0 0.0
        %848 = vmatmul.mubr.f32.gmra.mrb[0].mxu0 %v768
        %v849 = vpop.f32.mrb[0].mxu0
        %v850 = vadd.f32 0.0, %v849
        %v851 = vpop.f32.mrb[0].mxu0
        %852 = vmatprep.mubr.f32.mxu0 0.0
        %853 = vmatmul.mubr.f32.gmra.mrb[0].mxu0 %v771
        %v854 = vpop.f32.mrb[0].mxu0
        %v855 = vadd.f32 0.0, %v854
        %v856 = vpop.f32.mrb[0].mxu0
        %857 = vdwg.mxu0
        %v858 = vsub.f32 %v840, %v506
        %v859 = vsub.f32 %v845, %v507
        %v860 = vsub.f32 %v850, %v508
        %v861 = vsub.f32 %v855, %v509
        %v862 = vmul.f32 %v858, %v858
        %v863 = vmul.f32 %v859, %v859
        %v864 = vmul.f32 %v860, %v860
        %v865 = vmul.f32 %v861, %v861
        %v866 = vadd.f32 %v862, 0.0
        %v867 = vadd.f32 %v863, 0.0
        %v868 = vadd.f32 %v864, 0.0
        %v869 = vadd.f32 %v865, 0.0
        %v871 = vsel %vm526, %v486, 0
        %v874 = vsel %vm526, %v487, 0
        %v877 = vsel %vm526, %v488, 0
        %v880 = vsel %vm526, %v489, 0
        %882 = vmatprep.subr.mxu0 0.0
        %883 = vmatpush1.msra.mxu0 %v482
        %884 = vmatprep.subr.mxu0 0.0
        %885 = vmatpush1.msra.mxu0 %v483
        %886 = vmatprep.subr.mxu0 0.0
        %887 = vmatpush1.msra.mxu0 %v484
        %888 = vmatprep.subr.mxu0 0.0
        %889 = vmatpush1.msra.mxu0 %v485
        %890 = vmatprep.subr.mxu0 0.0
        %891 = vmatpush1.msra.mxu0 0.0
        %892 = vmatprep.subr.mxu0 0.0
        %893 = vmatpush1.msra.mxu0 0.0
        %894 = vmatprep.subr.mxu0 0.0
        %895 = vmatpush1.msra.mxu0 0.0
        %896 = vmatprep.subr.mxu0 0.0
        %897 = vmatpush1.msra.mxu0 0.0
        %898 = vmatprep.subr.mxu0 0.0
        %899 = vmatpush1.msra.mxu0 0.0
        %900 = vmatprep.subr.mxu0 0.0
        %901 = vmatpush1.msra.mxu0 0.0
        %902 = vmatprep.subr.mxu0 0.0
        %903 = vmatpush1.msra.mxu0 0.0
        %904 = vmatprep.subr.mxu0 0.0
        %905 = vmatpush1.msra.mxu0 0.0
        %906 = vmatprep.subr.mxu0 0.0
        %907 = vmatpush1.msra.mxu0 0.0
        %908 = vmatprep.subr.mxu0 0.0
        %909 = vmatpush1.msra.mxu0 0.0
        %910 = vmatprep.subr.mxu0 0.0
        %911 = vmatpush1.msra.mxu0 0.0
        %912 = vmatprep.subr.mxu0 0.0
        %913 = vmatpush1.msra.mxu0 0.0
        %914 = vmatprep.subr.mxu0 0.0
        %915 = vmatpush1.msra.mxu0 0.0
        %916 = vmatprep.subr.mxu0 0.0
        %917 = vmatpush1.msra.mxu0 0.0
        %918 = vmatprep.subr.mxu0 0.0
        %919 = vmatpush1.msra.mxu0 0.0
        %920 = vmatprep.subr.mxu0 0.0
        %921 = vmatpush1.msra.mxu0 0.0
        %922 = vmatprep.subr.mxu0 0.0
        %923 = vmatpush1.msra.mxu0 0.0
        %924 = vmatprep.subr.mxu0 0.0
        %925 = vmatpush1.msra.mxu0 0.0
        %926 = vmatprep.subr.mxu0 0.0
        %927 = vmatpush1.msra.mxu0 0.0
        %928 = vmatprep.subr.mxu0 0.0
        %929 = vmatpush1.msra.mxu0 0.0
        %930 = vmatprep.subr.mxu0 0.0
        %931 = vmatpush1.msra.mxu0 0.0
        %932 = vmatprep.subr.mxu0 0.0
        %933 = vmatpush1.msra.mxu0 0.0
        %934 = vmatprep.subr.mxu0 0.0
        %935 = vmatpush1.msra.mxu0 0.0
        %936 = vmatprep.subr.mxu0 0.0
        %937 = vmatpush1.msra.mxu0 0.0
        %938 = vmatprep.subr.mxu0 0.0
        %939 = vmatpush1.msra.mxu0 0.0
        %940 = vmatprep.subr.mxu0 0.0
        %941 = vmatpush1.msra.mxu0 0.0
        %942 = vmatprep.subr.mxu0 0.0
        %943 = vmatpush1.msra.mxu0 0.0
        %944 = vmatprep.subr.mxu0 0.0
        %945 = vmatpush1.msra.mxu0 0.0
        %946 = vmatprep.mubr.f32.mxu0 0.0
        %947 = vmatmul.mubr.f32.gmra.mrb[0].mxu0 %v871
        %v948 = vpop.f32.mrb[0].mxu0
        %v949 = vadd.f32 0.0, %v948
        %v950 = vpop.f32.mrb[0].mxu0
        %951 = vmatprep.mubr.f32.mxu0 0.0
        %952 = vmatmul.mubr.f32.gmra.mrb[0].mxu0 %v874
        %v953 = vpop.f32.mrb[0].mxu0
        %v954 = vadd.f32 0.0, %v953
        %v955 = vpop.f32.mrb[0].mxu0
        %956 = vmatprep.mubr.f32.mxu0 0.0
        %957 = vmatmul.mubr.f32.gmra.mrb[0].mxu0 %v877
        %v958 = vpop.f32.mrb[0].mxu0
        %v959 = vadd.f32 0.0, %v958
        %v960 = vpop.f32.mrb[0].mxu0
        %961 = vmatprep.mubr.f32.mxu0 0.0
        %962 = vmatmul.mubr.f32.gmra.mrb[0].mxu0 %v880
        %v963 = vpop.f32.mrb[0].mxu0
        %v964 = vadd.f32 0.0, %v963
        %v965 = vpop.f32.mrb[0].mxu0
        %966 = vdwg.mxu0
        %v967 = vsub.f32 %v949, %v506
        %v968 = vsub.f32 %v954, %v507
        %v969 = vsub.f32 %v959, %v508
        %v970 = vsub.f32 %v964, %v509
        %v971 = vmul.f32 %v967, %v967
        %v972 = vmul.f32 %v968, %v968
        %v973 = vmul.f32 %v969, %v969
        %v974 = vmul.f32 %v970, %v970
        %v975 = vadd.f32 %v866, %v971
        %v976 = vadd.f32 %v867, %v972
        %v977 = vadd.f32 %v868, %v973
        %v978 = vadd.f32 %v869, %v974
        %979 = vxpose.xlu0.b32.start [1/16] %v482, 128
        %980 = vxpose.xlu0.b32.cont [2/16] %v483, 128
        %981 = vxpose.xlu0.b32.cont [3/16] %v484, 128
        %982 = vxpose.xlu0.b32.cont [4/16] %v485, 128
        %983 = vxpose.xlu0.b32.cont [5/16] 0.0, 128
        %984 = vxpose.xlu0.b32.cont [6/16] 0.0, 128
        %985 = vxpose.xlu0.b32.cont [7/16] 0.0, 128
        %986 = vxpose.xlu0.b32.cont [8/16] 0.0, 128
        %987 = vxpose.xlu0.b32.cont [9/16] 0.0, 128
        %988 = vxpose.xlu0.b32.cont [10/16] 0.0, 128
        %989 = vxpose.xlu0.b32.cont [11/16] 0.0, 128
        %990 = vxpose.xlu0.b32.cont [12/16] 0.0, 128
        %991 = vxpose.xlu0.b32.cont [13/16] 0.0, 128
        %992 = vxpose.xlu0.b32.cont [14/16] 0.0, 128
        %993 = vxpose.xlu0.b32.cont [15/16] 0.0, 128
        %994 = vxpose.xlu0.b32.end [16/16] 0.0, 128
        %v995 = vpop.trf.xlu0
        %v996 = vpop.trf.xlu0
        %v997 = vpop.trf.xlu0
        %v998 = vpop.trf.xlu0
        %v999 = vpop.trf.xlu0
        %v1000 = vpop.trf.xlu0
        %v1001 = vpop.trf.xlu0
        %v1002 = vpop.trf.xlu0
        %v1003 = vpop.trf.xlu0
        %v1004 = vpop.trf.xlu0
        %v1005 = vpop.trf.xlu0
        %v1006 = vpop.trf.xlu0
        %v1007 = vpop.trf.xlu0
        %v1008 = vpop.trf.xlu0
        %v1009 = vpop.trf.xlu0
        %v1010 = vpop.trf.xlu0
        %v1012 = vsel %vm526, %v995, 0
        %v1015 = vsel %vm526, %v996, 0
        %v1018 = vsel %vm526, %v997, 0
        %v1021 = vsel %vm526, %v998, 0
        %1023 = vmatprep.subr.mxu0 0.0
        %1024 = vmatpush1.msra.mxu0 %v482
        %1025 = vmatprep.subr.mxu0 0.0
        %1026 = vmatpush1.msra.mxu0 %v483
        %1027 = vmatprep.subr.mxu0 0.0
        %1028 = vmatpush1.msra.mxu0 %v484
        %1029 = vmatprep.subr.mxu0 0.0
        %1030 = vmatpush1.msra.mxu0 %v485
        %1031 = vmatprep.subr.mxu0 0.0
        %1032 = vmatpush1.msra.mxu0 0.0
        %1033 = vmatprep.subr.mxu0 0.0
        %1034 = vmatpush1.msra.mxu0 0.0
        %1035 = vmatprep.subr.mxu0 0.0
        %1036 = vmatpush1.msra.mxu0 0.0
        %1037 = vmatprep.subr.mxu0 0.0
        %1038 = vmatpush1.msra.mxu0 0.0
        %1039 = vmatprep.subr.mxu0 0.0
        %1040 = vmatpush1.msra.mxu0 0.0
        %1041 = vmatprep.subr.mxu0 0.0
        %1042 = vmatpush1.msra.mxu0 0.0
        %1043 = vmatprep.subr.mxu0 0.0
        %1044 = vmatpush1.msra.mxu0 0.0
        %1045 = vmatprep.subr.mxu0 0.0
        %1046 = vmatpush1.msra.mxu0 0.0
        %1047 = vmatprep.subr.mxu0 0.0
        %1048 = vmatpush1.msra.mxu0 0.0
        %1049 = vmatprep.subr.mxu0 0.0
        %1050 = vmatpush1.msra.mxu0 0.0
        %1051 = vmatprep.subr.mxu0 0.0
        %1052 = vmatpush1.msra.mxu0 0.0
        %1053 = vmatprep.subr.mxu0 0.0
        %1054 = vmatpush1.msra.mxu0 0.0
        %1055 = vmatprep.subr.mxu0 0.0
        %1056 = vmatpush1.msra.mxu0 0.0
        %1057 = vmatprep.subr.mxu0 0.0
        %1058 = vmatpush1.msra.mxu0 0.0
        %1059 = vmatprep.subr.mxu0 0.0
        %1060 = vmatpush1.msra.mxu0 0.0
        %1061 = vmatprep.subr.mxu0 0.0
        %1062 = vmatpush1.msra.mxu0 0.0
        %1063 = vmatprep.subr.mxu0 0.0
        %1064 = vmatpush1.msra.mxu0 0.0
        %1065 = vmatprep.subr.mxu0 0.0
        %1066 = vmatpush1.msra.mxu0 0.0
        %1067 = vmatprep.subr.mxu0 0.0
        %1068 = vmatpush1.msra.mxu0 0.0
        %1069 = vmatprep.subr.mxu0 0.0
        %1070 = vmatpush1.msra.mxu0 0.0
        %1071 = vmatprep.subr.mxu0 0.0
        %1072 = vmatpush1.msra.mxu0 0.0
        %1073 = vmatprep.subr.mxu0 0.0
        %1074 = vmatpush1.msra.mxu0 0.0
        %1075 = vmatprep.subr.mxu0 0.0
        %1076 = vmatpush1.msra.mxu0 0.0
        %1077 = vmatprep.subr.mxu0 0.0
        %1078 = vmatpush1.msra.mxu0 0.0
        %1079 = vmatprep.subr.mxu0 0.0
        %1080 = vmatpush1.msra.mxu0 0.0
        %1081 = vmatprep.subr.mxu0 0.0
        %1082 = vmatpush1.msra.mxu0 0.0
        %1083 = vmatprep.subr.mxu0 0.0
        %1084 = vmatpush1.msra.mxu0 0.0
        %1085 = vmatprep.subr.mxu0 0.0
        %1086 = vmatpush1.msra.mxu0 0.0
        %1087 = vmatprep.mubr.f32.mxu0 0.0
        %1088 = vmatmul.mubr.f32.gmra.mrb[0].mxu0 %v1012
        %v1089 = vpop.f32.mrb[0].mxu0
        %v1090 = vadd.f32 0.0, %v1089
        %v1091 = vpop.f32.mrb[0].mxu0
        %1092 = vmatprep.mubr.f32.mxu0 0.0
        %1093 = vmatmul.mubr.f32.gmra.mrb[0].mxu0 %v1015
        %v1094 = vpop.f32.mrb[0].mxu0
        %v1095 = vadd.f32 0.0, %v1094
        %v1096 = vpop.f32.mrb[0].mxu0
        %1097 = vmatprep.mubr.f32.mxu0 0.0
        %1098 = vmatmul.mubr.f32.gmra.mrb[0].mxu0 %v1018
        %v1099 = vpop.f32.mrb[0].mxu0
        %v1100 = vadd.f32 0.0, %v1099
        %v1101 = vpop.f32.mrb[0].mxu0
        %1102 = vmatprep.mubr.f32.mxu0 0.0
        %1103 = vmatmul.mubr.f32.gmra.mrb[0].mxu0 %v1021
        %v1104 = vpop.f32.mrb[0].mxu0
        %v1105 = vadd.f32 0.0, %v1104
        %v1106 = vpop.f32.mrb[0].mxu0
        %1107 = vdwg.mxu0
        %v1108 = vsub.f32 %v1090, %v506
        %v1109 = vsub.f32 %v1095, %v507
        %v1110 = vsub.f32 %v1100, %v508
        %v1111 = vsub.f32 %v1105, %v509
        %v1112 = vmul.f32 %v1108, %v1108
        %v1113 = vmul.f32 %v1109, %v1109
        %v1114 = vmul.f32 %v1110, %v1110
        %v1115 = vmul.f32 %v1111, %v1111
        %v1116 = vadd.f32 %v1112, 0.0
        %v1117 = vadd.f32 %v1113, 0.0
        %v1118 = vadd.f32 %v1114, 0.0
        %v1119 = vadd.f32 %v1115, 0.0
        %1120 = vxpose.xlu0.b32.start [1/16] %v486, 128
        %1121 = vxpose.xlu0.b32.cont [2/16] %v487, 128
        %1122 = vxpose.xlu0.b32.cont [3/16] %v488, 128
        %1123 = vxpose.xlu0.b32.cont [4/16] %v489, 128
        %1124 = vxpose.xlu0.b32.cont [5/16] 0.0, 128
        %1125 = vxpose.xlu0.b32.cont [6/16] 0.0, 128
        %1126 = vxpose.xlu0.b32.cont [7/16] 0.0, 128
        %1127 = vxpose.xlu0.b32.cont [8/16] 0.0, 128
        %1128 = vxpose.xlu0.b32.cont [9/16] 0.0, 128
        %1129 = vxpose.xlu0.b32.cont [10/16] 0.0, 128
        %1130 = vxpose.xlu0.b32.cont [11/16] 0.0, 128
        %1131 = vxpose.xlu0.b32.cont [12/16] 0.0, 128
        %1132 = vxpose.xlu0.b32.cont [13/16] 0.0, 128
        %1133 = vxpose.xlu0.b32.cont [14/16] 0.0, 128
        %1134 = vxpose.xlu0.b32.cont [15/16] 0.0, 128
        %1135 = vxpose.xlu0.b32.end [16/16] 0.0, 128
        %v1136 = vpop.trf.xlu0
        %v1137 = vpop.trf.xlu0
        %v1138 = vpop.trf.xlu0
        %v1139 = vpop.trf.xlu0
        %v1140 = vpop.trf.xlu0
        %v1141 = vpop.trf.xlu0
        %v1142 = vpop.trf.xlu0
        %v1143 = vpop.trf.xlu0
        %v1144 = vpop.trf.xlu0
        %v1145 = vpop.trf.xlu0
        %v1146 = vpop.trf.xlu0
        %v1147 = vpop.trf.xlu0
        %v1148 = vpop.trf.xlu0
        %v1149 = vpop.trf.xlu0
        %v1150 = vpop.trf.xlu0
        %v1151 = vpop.trf.xlu0
        %v1153 = vsel %vm526, %v1136, 0
        %v1156 = vsel %vm526, %v1137, 0
        %v1159 = vsel %vm526, %v1138, 0
        %v1162 = vsel %vm526, %v1139, 0
        %1164 = vmatprep.subr.mxu0 0.0
        %1165 = vmatpush1.msra.mxu0 %v486
        %1166 = vmatprep.subr.mxu0 0.0
        %1167 = vmatpush1.msra.mxu0 %v487
        %1168 = vmatprep.subr.mxu0 0.0
        %1169 = vmatpush1.msra.mxu0 %v488
        %1170 = vmatprep.subr.mxu0 0.0
        %1171 = vmatpush1.msra.mxu0 %v489
        %1172 = vmatprep.subr.mxu0 0.0
        %1173 = vmatpush1.msra.mxu0 0.0
        %1174 = vmatprep.subr.mxu0 0.0
        %1175 = vmatpush1.msra.mxu0 0.0
        %1176 = vmatprep.subr.mxu0 0.0
        %1177 = vmatpush1.msra.mxu0 0.0
        %1178 = vmatprep.subr.mxu0 0.0
        %1179 = vmatpush1.msra.mxu0 0.0
        %1180 = vmatprep.subr.mxu0 0.0
        %1181 = vmatpush1.msra.mxu0 0.0
        %1182 = vmatprep.subr.mxu0 0.0
        %1183 = vmatpush1.msra.mxu0 0.0
        %1184 = vmatprep.subr.mxu0 0.0
        %1185 = vmatpush1.msra.mxu0 0.0
        %1186 = vmatprep.subr.mxu0 0.0
        %1187 = vmatpush1.msra.mxu0 0.0
        %1188 = vmatprep.subr.mxu0 0.0
        %1189 = vmatpush1.msra.mxu0 0.0
        %1190 = vmatprep.subr.mxu0 0.0
        %1191 = vmatpush1.msra.mxu0 0.0
        %1192 = vmatprep.subr.mxu0 0.0
        %1193 = vmatpush1.msra.mxu0 0.0
        %1194 = vmatprep.subr.mxu0 0.0
        %1195 = vmatpush1.msra.mxu0 0.0
        %1196 = vmatprep.subr.mxu0 0.0
        %1197 = vmatpush1.msra.mxu0 0.0
        %1198 = vmatprep.subr.mxu0 0.0
        %1199 = vmatpush1.msra.mxu0 0.0
        %1200 = vmatprep.subr.mxu0 0.0
        %1201 = vmatpush1.msra.mxu0 0.0
        %1202 = vmatprep.subr.mxu0 0.0
        %1203 = vmatpush1.msra.mxu0 0.0
        %1204 = vmatprep.subr.mxu0 0.0
        %1205 = vmatpush1.msra.mxu0 0.0
        %1206 = vmatprep.subr.mxu0 0.0
        %1207 = vmatpush1.msra.mxu0 0.0
        %1208 = vmatprep.subr.mxu0 0.0
        %1209 = vmatpush1.msra.mxu0 0.0
        %1210 = vmatprep.subr.mxu0 0.0
        %1211 = vmatpush1.msra.mxu0 0.0
        %1212 = vmatprep.subr.mxu0 0.0
        %1213 = vmatpush1.msra.mxu0 0.0
        %1214 = vmatprep.subr.mxu0 0.0
        %1215 = vmatpush1.msra.mxu0 0.0
        %1216 = vmatprep.subr.mxu0 0.0
        %1217 = vmatpush1.msra.mxu0 0.0
        %1218 = vmatprep.subr.mxu0 0.0
        %1219 = vmatpush1.msra.mxu0 0.0
        %1220 = vmatprep.subr.mxu0 0.0
        %1221 = vmatpush1.msra.mxu0 0.0
        %1222 = vmatprep.subr.mxu0 0.0
        %1223 = vmatpush1.msra.mxu0 0.0
        %1224 = vmatprep.subr.mxu0 0.0
        %1225 = vmatpush1.msra.mxu0 0.0
        %1226 = vmatprep.subr.mxu0 0.0
        %1227 = vmatpush1.msra.mxu0 0.0
        %1228 = vmatprep.mubr.f32.mxu0 0.0
        %1229 = vmatmul.mubr.f32.gmra.mrb[0].mxu0 %v1153
        %v1230 = vpop.f32.mrb[0].mxu0
        %v1231 = vadd.f32 0.0, %v1230
        %v1232 = vpop.f32.mrb[0].mxu0
        %1233 = vmatprep.mubr.f32.mxu0 0.0
        %1234 = vmatmul.mubr.f32.gmra.mrb[0].mxu0 %v1156
        %v1235 = vpop.f32.mrb[0].mxu0
        %v1236 = vadd.f32 0.0, %v1235
        %v1237 = vpop.f32.mrb[0].mxu0
        %1238 = vmatprep.mubr.f32.mxu0 0.0
        %1239 = vmatmul.mubr.f32.gmra.mrb[0].mxu0 %v1159
        %v1240 = vpop.f32.mrb[0].mxu0
        %v1241 = vadd.f32 0.0, %v1240
        %v1242 = vpop.f32.mrb[0].mxu0
        %1243 = vmatprep.mubr.f32.mxu0 0.0
        %1244 = vmatmul.mubr.f32.gmra.mrb[0].mxu0 %v1162
        %v1245 = vpop.f32.mrb[0].mxu0
        %v1246 = vadd.f32 0.0, %v1245
        %v1247 = vpop.f32.mrb[0].mxu0
        %1248 = vdwg.mxu0
        %v1249 = vsub.f32 %v1231, %v506
        %v1250 = vsub.f32 %v1236, %v507
        %v1251 = vsub.f32 %v1241, %v508
        %v1252 = vsub.f32 %v1246, %v509
        %v1253 = vmul.f32 %v1249, %v1249
        %v1254 = vmul.f32 %v1250, %v1250
        %v1255 = vmul.f32 %v1251, %v1251
        %v1256 = vmul.f32 %v1252, %v1252
        %v1257 = vadd.f32 %v1116, %v1253
        %v1258 = vadd.f32 %v1117, %v1254
        %v1259 = vadd.f32 %v1118, %v1255
        %v1260 = vadd.f32 %v1119, %v1256
        %v1261 = vpack.c.bf16 %v483, %v482
        %v1262 = vpack.c.bf16 %v485, %v484
        %v1263 = vpack.c.bf16 %v487, %v486
        %v1264 = vpack.c.bf16 %v489, %v488
        %v1265 = vld [vmem:[%s453] sm:$0xf]
        %v1266 = vld [vmem:[%s453 + $0x4] sm:$0xf]
        %v1267 = vld [vmem:[%s453 + $0x8] sm:$0xf]
        %v1268 = vld [vmem:[%s453 + $0xc] sm:$0xf]
        %v1269 = vld [vmem:[%s453 + $0x10] sm:$0xf]
        %v1270 = vld [vmem:[%s453 + $0x14] sm:$0xf]
        %v1271 = vld [vmem:[%s453 + $0x18] sm:$0xf]
        %v1272 = vld [vmem:[%s453 + $0x1c] sm:$0xf]
        %v1273 = vld [vmem:[%s453 + $0x20] sm:$0xf]
        %v1274 = vld [vmem:[%s453 + $0x24] sm:$0xf]
        %v1275 = vld [vmem:[%s453 + $0x28] sm:$0xf]
        %v1276 = vld [vmem:[%s453 + $0x2c] sm:$0xf]
        %v1277 = vld [vmem:[%s453 + $0x30] sm:$0xf]
        %v1278 = vld [vmem:[%s453 + $0x34] sm:$0xf]
        %v1279 = vld [vmem:[%s453 + $0x38] sm:$0xf]
        %v1280 = vld [vmem:[%s453 + $0x3c] sm:$0xf]
        %v1281 = vld [vmem:[%s458] sm:$0xf]
        %v1282 = vld [vmem:[%s458 + $0x4] sm:$0xf]
        %v1283 = vld [vmem:[%s458 + $0x8] sm:$0xf]
        %v1284 = vld [vmem:[%s458 + $0xc] sm:$0xf]
        %v1285 = vld [vmem:[%s458 + $0x10] sm:$0xf]
        %v1286 = vld [vmem:[%s458 + $0x14] sm:$0xf]
        %v1287 = vld [vmem:[%s458 + $0x18] sm:$0xf]
        %v1288 = vld [vmem:[%s458 + $0x1c] sm:$0xf]
        %v1289 = vld [vmem:[%s458 + $0x20] sm:$0xf]
        %v1290 = vld [vmem:[%s458 + $0x24] sm:$0xf]
        %v1291 = vld [vmem:[%s458 + $0x28] sm:$0xf]
        %v1292 = vld [vmem:[%s458 + $0x2c] sm:$0xf]
        %v1293 = vld [vmem:[%s458 + $0x30] sm:$0xf]
        %v1294 = vld [vmem:[%s458 + $0x34] sm:$0xf]
        %v1295 = vld [vmem:[%s458 + $0x38] sm:$0xf]
        %v1296 = vld [vmem:[%s458 + $0x3c] sm:$0xf]
        %v1297 = vld [vmem:[%s463] sm:$0xf]
        %v1298 = vld [vmem:[%s463 + $0x4] sm:$0xf]
        %v1299 = vld [vmem:[%s463 + $0x8] sm:$0xf]
        %v1300 = vld [vmem:[%s463 + $0xc] sm:$0xf]
        %v1301 = vld [vmem:[%s468] sm:$0xf]
        %v1302 = vld [vmem:[%s468 + $0x4] sm:$0xf]
        %v1303 = vld [vmem:[%s468 + $0x8] sm:$0xf]
        %v1304 = vld [vmem:[%s468 + $0xc] sm:$0xf]
        %v1305 = vld [vmem:[%s472] sm:$0x7]
        %v1306 = vld [vmem:[%s476] sm:$0x7]
        %v1311 = vunpack.c.l.b16 %v1297
        %v1312 = vunpack.c.l.b16 %v1298
        %v1313 = vunpack.c.l.b16 %v1299
        %v1314 = vunpack.c.l.b16 %v1300
        %v1315 = vpack.c.b16 %v1312, %v1311
        %v1316 = vpack.c.b16 %v1314, %v1313
        %v1320 = vsel %vm526, %v1261, 0
        %v1323 = vsel %vm526, %v1262, 0
        %1325 = vmatprep.subr.bf16.mxu0 0
        %1326 = vmatpush1.bf16.msra.mxu0 %v1315
        %1327 = vmatprep.subr.bf16.mxu0 0
        %1328 = vmatpush1.bf16.msra.mxu0 %v1316
        %1329 = vmatprep.subr.bf16.mxu0 0
        %1330 = vmatpush1.bf16.msra.mxu0 0
        %1331 = vmatprep.subr.bf16.mxu0 0
        %1332 = vmatpush1.bf16.msra.mxu0 0
        %1333 = vmatprep.subr.bf16.mxu0 0
        %1334 = vmatpush1.bf16.msra.mxu0 0
        %1335 = vmatprep.subr.bf16.mxu0 0
        %1336 = vmatpush1.bf16.msra.mxu0 0
        %1337 = vmatprep.subr.bf16.mxu0 0
        %1338 = vmatpush1.bf16.msra.mxu0 0
        %1339 = vmatprep.subr.bf16.mxu0 0
        %1340 = vmatpush1.bf16.msra.mxu0 0
        %1341 = vmatprep.subr.bf16.mxu0 0
        %1342 = vmatpush1.bf16.msra.mxu0 0
        %1343 = vmatprep.subr.bf16.mxu0 0
        %1344 = vmatpush1.bf16.msra.mxu0 0
        %1345 = vmatprep.subr.bf16.mxu0 0
        %1346 = vmatpush1.bf16.msra.mxu0 0
        %1347 = vmatprep.subr.bf16.mxu0 0
        %1348 = vmatpush1.bf16.msra.mxu0 0
        %1349 = vmatprep.subr.bf16.mxu0 0
        %1350 = vmatpush1.bf16.msra.mxu0 0
        %1351 = vmatprep.subr.bf16.mxu0 0
        %1352 = vmatpush1.bf16.msra.mxu0 0
        %1353 = vmatprep.subr.bf16.mxu0 0
        %1354 = vmatpush1.bf16.msra.mxu0 0
        %1355 = vmatprep.subr.bf16.mxu0 0
        %1356 = vmatpush1.bf16.msra.mxu0 0
        %1357 = vmatprep.mubr.bf16.mxu0 0
        %1358 = vmatmul.mubr.bf16.gmra.mrb[0].mxu0 %v1320
        %v1359 = vpop.f32.mrb[0].mxu0
        %v1360 = vadd.f32 0.0, %v1359
        %v1361 = vpop.f32.mrb[0].mxu0
        %v1362 = vpop.f32.mrb[0].mxu0
        %v1363 = vadd.f32 0.0, %v1362
        %v1364 = vpop.f32.mrb[0].mxu0
        %1365 = vmatprep.mubr.bf16.mxu0 0
        %1366 = vmatmul.mubr.bf16.gmra.mrb[0].mxu0 %v1323
        %v1367 = vpop.f32.mrb[0].mxu0
        %v1368 = vadd.f32 0.0, %v1367
        %v1369 = vpop.f32.mrb[0].mxu0
        %v1370 = vpop.f32.mrb[0].mxu0
        %v1371 = vadd.f32 0.0, %v1370
        %v1372 = vpop.f32.mrb[0].mxu0
        %1373 = vdwg.mxu0
        %v1374 = vpack.c.bf16 %v1363, %v1360
        %v1375 = vpack.c.bf16 %v1371, %v1368
        %v1380 = vunpack.c.l.b16 %v1301
        %v1381 = vunpack.c.l.b16 %v1302
        %v1382 = vunpack.c.l.b16 %v1303
        %v1383 = vunpack.c.l.b16 %v1304
        %v1384 = vpack.c.b16 %v1381, %v1380
        %v1385 = vpack.c.b16 %v1383, %v1382
        %v1389 = vsel %vm526, %v1263, 0
        %v1392 = vsel %vm526, %v1264, 0
        %1394 = vmatprep.subr.bf16.mxu0 0
        %1395 = vmatpush1.bf16.msra.mxu0 %v1384
        %1396 = vmatprep.subr.bf16.mxu0 0
        %1397 = vmatpush1.bf16.msra.mxu0 %v1385
        %1398 = vmatprep.subr.bf16.mxu0 0
        %1399 = vmatpush1.bf16.msra.mxu0 0
        %1400 = vmatprep.subr.bf16.mxu0 0
        %1401 = vmatpush1.bf16.msra.mxu0 0
        %1402 = vmatprep.subr.bf16.mxu0 0
        %1403 = vmatpush1.bf16.msra.mxu0 0
        %1404 = vmatprep.subr.bf16.mxu0 0
        %1405 = vmatpush1.bf16.msra.mxu0 0
        %1406 = vmatprep.subr.bf16.mxu0 0
        %1407 = vmatpush1.bf16.msra.mxu0 0
        %1408 = vmatprep.subr.bf16.mxu0 0
        %1409 = vmatpush1.bf16.msra.mxu0 0
        %1410 = vmatprep.subr.bf16.mxu0 0
        %1411 = vmatpush1.bf16.msra.mxu0 0
        %1412 = vmatprep.subr.bf16.mxu0 0
        %1413 = vmatpush1.bf16.msra.mxu0 0
        %1414 = vmatprep.subr.bf16.mxu0 0
        %1415 = vmatpush1.bf16.msra.mxu0 0
        %1416 = vmatprep.subr.bf16.mxu0 0
        %1417 = vmatpush1.bf16.msra.mxu0 0
        %1418 = vmatprep.subr.bf16.mxu0 0
        %1419 = vmatpush1.bf16.msra.mxu0 0
        %1420 = vmatprep.subr.bf16.mxu0 0
        %1421 = vmatpush1.bf16.msra.mxu0 0
        %1422 = vmatprep.subr.bf16.mxu0 0
        %1423 = vmatpush1.bf16.msra.mxu0 0
        %1424 = vmatprep.subr.bf16.mxu0 0
        %1425 = vmatpush1.bf16.msra.mxu0 0
        %1426 = vmatprep.mubr.bf16.mxu0 0
        %1427 = vmatmul.mubr.bf16.gmra.mrb[0].mxu0 %v1389
        %v1428 = vpop.f32.mrb[0].mxu0
        %v1429 = vadd.f32 0.0, %v1428
        %v1430 = vpop.f32.mrb[0].mxu0
        %v1431 = vpop.f32.mrb[0].mxu0
        %v1432 = vadd.f32 0.0, %v1431
        %v1433 = vpop.f32.mrb[0].mxu0
        %1434 = vmatprep.mubr.bf16.mxu0 0
        %1435 = vmatmul.mubr.bf16.gmra.mrb[0].mxu0 %v1392
        %v1436 = vpop.f32.mrb[0].mxu0
        %v1437 = vadd.f32 0.0, %v1436
        %v1438 = vpop.f32.mrb[0].mxu0
        %v1439 = vpop.f32.mrb[0].mxu0
        %v1440 = vadd.f32 0.0, %v1439
        %v1441 = vpop.f32.mrb[0].mxu0
        %1442 = vdwg.mxu0
        %v1443 = vpack.c.bf16 %v1432, %v1429
        %v1444 = vpack.c.bf16 %v1440, %v1437
        %v1461 = vunpack.c.l.b16 %v1281
        %v1462 = vunpack.c.l.b16 %v1282
        %v1463 = vunpack.c.l.b16 %v1283
        %v1464 = vunpack.c.l.b16 %v1284
        %v1465 = vunpack.c.l.b16 %v1285
        %v1466 = vunpack.c.l.b16 %v1286
        %v1467 = vunpack.c.l.b16 %v1287
        %v1468 = vunpack.c.l.b16 %v1288
        %v1469 = vunpack.c.l.b16 %v1289
        %v1470 = vunpack.c.l.b16 %v1290
        %v1471 = vunpack.c.l.b16 %v1291
        %v1472 = vunpack.c.l.b16 %v1292
        %v1473 = vunpack.c.l.b16 %v1293
        %v1474 = vunpack.c.l.b16 %v1294
        %v1475 = vunpack.c.l.b16 %v1295
        %v1476 = vunpack.c.l.b16 %v1296
        %v1477 = vpack.c.b16 %v1462, %v1461
        %v1478 = vpack.c.b16 %v1464, %v1463
        %v1479 = vpack.c.b16 %v1466, %v1465
        %v1480 = vpack.c.b16 %v1468, %v1467
        %v1481 = vpack.c.b16 %v1470, %v1469
        %v1482 = vpack.c.b16 %v1472, %v1471
        %v1483 = vpack.c.b16 %v1474, %v1473
        %v1484 = vpack.c.b16 %v1476, %v1475
        %v1486 = vsel %vm526, %v1477, 0
        %v1489 = vsel %vm526, %v1478, 0
        %v1492 = vsel %vm526, %v1479, 0
        %v1495 = vsel %vm526, %v1480, 0
        %v1498 = vsel %vm526, %v1481, 0
        %v1501 = vsel %vm526, %v1482, 0
        %v1504 = vsel %vm526, %v1483, 0
        %v1507 = vsel %vm526, %v1484, 0
        %1509 = vmatprep.subr.bf16.mxu0 0
        %1510 = vmatpush1.bf16.msra.mxu0 %v1261
        %1511 = vmatprep.subr.bf16.mxu0 0
        %1512 = vmatpush1.bf16.msra.mxu0 %v1262
        %1513 = vmatprep.subr.bf16.mxu0 0
        %1514 = vmatpush1.bf16.msra.mxu0 0
        %1515 = vmatprep.subr.bf16.mxu0 0
        %1516 = vmatpush1.bf16.msra.mxu0 0
        %1517 = vmatprep.subr.bf16.mxu0 0
        %1518 = vmatpush1.bf16.msra.mxu0 0
        %1519 = vmatprep.subr.bf16.mxu0 0
        %1520 = vmatpush1.bf16.msra.mxu0 0
        %1521 = vmatprep.subr.bf16.mxu0 0
        %1522 = vmatpush1.bf16.msra.mxu0 0
        %1523 = vmatprep.subr.bf16.mxu0 0
        %1524 = vmatpush1.bf16.msra.mxu0 0
        %1525 = vmatprep.subr.bf16.mxu0 0
        %1526 = vmatpush1.bf16.msra.mxu0 0
        %1527 = vmatprep.subr.bf16.mxu0 0
        %1528 = vmatpush1.bf16.msra.mxu0 0
        %1529 = vmatprep.subr.bf16.mxu0 0
        %1530 = vmatpush1.bf16.msra.mxu0 0
        %1531 = vmatprep.subr.bf16.mxu0 0
        %1532 = vmatpush1.bf16.msra.mxu0 0
        %1533 = vmatprep.subr.bf16.mxu0 0
        %1534 = vmatpush1.bf16.msra.mxu0 0
        %1535 = vmatprep.subr.bf16.mxu0 0
        %1536 = vmatpush1.bf16.msra.mxu0 0
        %1537 = vmatprep.subr.bf16.mxu0 0
        %1538 = vmatpush1.bf16.msra.mxu0 0
        %1539 = vmatprep.subr.bf16.mxu0 0
        %1540 = vmatpush1.bf16.msra.mxu0 0
        %1541 = vmatprep.mubr.bf16.mxu0 0
        %1542 = vmatmul.mubr.bf16.gmra.mrb[0].mxu0 %v1486
        %v1543 = vpop.f32.mrb[0].mxu0
        %v1544 = vadd.f32 0.0, %v1543
        %v1545 = vpop.f32.mrb[0].mxu0
        %v1546 = vpop.f32.mrb[0].mxu0
        %v1547 = vadd.f32 0.0, %v1546
        %v1548 = vpop.f32.mrb[0].mxu0
        %1549 = vmatprep.mubr.bf16.mxu0 0
        %1550 = vmatmul.mubr.bf16.gmra.mrb[0].mxu0 %v1489
        %v1551 = vpop.f32.mrb[0].mxu0
        %v1552 = vadd.f32 0.0, %v1551
        %v1553 = vpop.f32.mrb[0].mxu0
        %v1554 = vpop.f32.mrb[0].mxu0
        %v1555 = vadd.f32 0.0, %v1554
        %v1556 = vpop.f32.mrb[0].mxu0
        %1557 = vmatprep.mubr.bf16.mxu0 0
        %1558 = vmatmul.mubr.bf16.gmra.mrb[0].mxu0 %v1492
        %v1559 = vpop.f32.mrb[0].mxu0
        %v1560 = vadd.f32 0.0, %v1559
        %v1561 = vpop.f32.mrb[0].mxu0
        %v1562 = vpop.f32.mrb[0].mxu0
        %v1563 = vadd.f32 0.0, %v1562
        %v1564 = vpop.f32.mrb[0].mxu0
        %1565 = vmatprep.mubr.bf16.mxu0 0
        %1566 = vmatmul.mubr.bf16.gmra.mrb[0].mxu0 %v1495
        %v1567 = vpop.f32.mrb[0].mxu0
        %v1568 = vadd.f32 0.0, %v1567
        %v1569 = vpop.f32.mrb[0].mxu0
        %v1570 = vpop.f32.mrb[0].mxu0
        %v1571 = vadd.f32 0.0, %v1570
        %v1572 = vpop.f32.mrb[0].mxu0
        %1573 = vmatprep.mubr.bf16.mxu0 0
        %1574 = vmatmul.mubr.bf16.gmra.mrb[0].mxu0 %v1498
        %v1575 = vpop.f32.mrb[0].mxu0
        %v1576 = vadd.f32 0.0, %v1575
        %v1577 = vpop.f32.mrb[0].mxu0
        %v1578 = vpop.f32.mrb[0].mxu0
        %v1579 = vadd.f32 0.0, %v1578
        %v1580 = vpop.f32.mrb[0].mxu0
        %1581 = vmatprep.mubr.bf16.mxu0 0
        %1582 = vmatmul.mubr.bf16.gmra.mrb[0].mxu0 %v1501
        %v1583 = vpop.f32.mrb[0].mxu0
        %v1584 = vadd.f32 0.0, %v1583
        %v1585 = vpop.f32.mrb[0].mxu0
        %v1586 = vpop.f32.mrb[0].mxu0
        %v1587 = vadd.f32 0.0, %v1586
        %v1588 = vpop.f32.mrb[0].mxu0
        %1589 = vmatprep.mubr.bf16.mxu0 0
        %1590 = vmatmul.mubr.bf16.gmra.mrb[0].mxu0 %v1504
        %v1591 = vpop.f32.mrb[0].mxu0
        %v1592 = vadd.f32 0.0, %v1591
        %v1593 = vpop.f32.mrb[0].mxu0
        %v1594 = vpop.f32.mrb[0].mxu0
        %v1595 = vadd.f32 0.0, %v1594
        %v1596 = vpop.f32.mrb[0].mxu0
        %1597 = vmatprep.mubr.bf16.mxu0 0
        %1598 = vmatmul.mubr.bf16.gmra.mrb[0].mxu0 %v1507
        %v1599 = vpop.f32.mrb[0].mxu0
        %v1600 = vadd.f32 0.0, %v1599
        %v1601 = vpop.f32.mrb[0].mxu0
        %v1602 = vpop.f32.mrb[0].mxu0
        %v1603 = vadd.f32 0.0, %v1602
        %v1604 = vpop.f32.mrb[0].mxu0
        %1605 = vdwg.mxu0
        %v1606 = vpack.c.bf16 %v1547, %v1544
        %v1607 = vpack.c.bf16 %v1555, %v1552
        %v1608 = vpack.c.bf16 %v1563, %v1560
        %v1609 = vpack.c.bf16 %v1571, %v1568
        %v1610 = vpack.c.bf16 %v1579, %v1576
        %v1611 = vpack.c.bf16 %v1587, %v1584
        %v1612 = vpack.c.bf16 %v1595, %v1592
        %v1613 = vpack.c.bf16 %v1603, %v1600
        %v1630 = vunpack.c.l.b16 %v1265
        %v1631 = vunpack.c.l.b16 %v1266
        %v1632 = vunpack.c.l.b16 %v1267
        %v1633 = vunpack.c.l.b16 %v1268
        %v1634 = vunpack.c.l.b16 %v1269
        %v1635 = vunpack.c.l.b16 %v1270
        %v1636 = vunpack.c.l.b16 %v1271
        %v1637 = vunpack.c.l.b16 %v1272
        %v1638 = vunpack.c.l.b16 %v1273
        %v1639 = vunpack.c.l.b16 %v1274
        %v1640 = vunpack.c.l.b16 %v1275
        %v1641 = vunpack.c.l.b16 %v1276
        %v1642 = vunpack.c.l.b16 %v1277
        %v1643 = vunpack.c.l.b16 %v1278
        %v1644 = vunpack.c.l.b16 %v1279
        %v1645 = vunpack.c.l.b16 %v1280
        %v1646 = vpack.c.b16 %v1631, %v1630
        %v1647 = vpack.c.b16 %v1633, %v1632
        %v1648 = vpack.c.b16 %v1635, %v1634
        %v1649 = vpack.c.b16 %v1637, %v1636
        %v1650 = vpack.c.b16 %v1639, %v1638
        %v1651 = vpack.c.b16 %v1641, %v1640
        %v1652 = vpack.c.b16 %v1643, %v1642
        %v1653 = vpack.c.b16 %v1645, %v1644
        %v1655 = vsel %vm526, %v1646, 0
        %v1658 = vsel %vm526, %v1647, 0
        %v1661 = vsel %vm526, %v1648, 0
        %v1664 = vsel %vm526, %v1649, 0
        %v1667 = vsel %vm526, %v1650, 0
        %v1670 = vsel %vm526, %v1651, 0
        %v1673 = vsel %vm526, %v1652, 0
        %v1676 = vsel %vm526, %v1653, 0
        %1678 = vmatprep.subr.bf16.mxu0 0
        %1679 = vmatpush1.bf16.msra.mxu0 %v1263
        %1680 = vmatprep.subr.bf16.mxu0 0
        %1681 = vmatpush1.bf16.msra.mxu0 %v1264
        %1682 = vmatprep.subr.bf16.mxu0 0
        %1683 = vmatpush1.bf16.msra.mxu0 0
        %1684 = vmatprep.subr.bf16.mxu0 0
        %1685 = vmatpush1.bf16.msra.mxu0 0
        %1686 = vmatprep.subr.bf16.mxu0 0
        %1687 = vmatpush1.bf16.msra.mxu0 0
        %1688 = vmatprep.subr.bf16.mxu0 0
        %1689 = vmatpush1.bf16.msra.mxu0 0
        %1690 = vmatprep.subr.bf16.mxu0 0
        %1691 = vmatpush1.bf16.msra.mxu0 0
        %1692 = vmatprep.subr.bf16.mxu0 0
        %1693 = vmatpush1.bf16.msra.mxu0 0
        %1694 = vmatprep.subr.bf16.mxu0 0
        %1695 = vmatpush1.bf16.msra.mxu0 0
        %1696 = vmatprep.subr.bf16.mxu0 0
        %1697 = vmatpush1.bf16.msra.mxu0 0
        %1698 = vmatprep.subr.bf16.mxu0 0
        %1699 = vmatpush1.bf16.msra.mxu0 0
        %1700 = vmatprep.subr.bf16.mxu0 0
        %1701 = vmatpush1.bf16.msra.mxu0 0
        %1702 = vmatprep.subr.bf16.mxu0 0
        %1703 = vmatpush1.bf16.msra.mxu0 0
        %1704 = vmatprep.subr.bf16.mxu0 0
        %1705 = vmatpush1.bf16.msra.mxu0 0
        %1706 = vmatprep.subr.bf16.mxu0 0
        %1707 = vmatpush1.bf16.msra.mxu0 0
        %1708 = vmatprep.subr.bf16.mxu0 0
        %1709 = vmatpush1.bf16.msra.mxu0 0
        %1710 = vmatprep.mubr.bf16.mxu0 0
        %1711 = vmatmul.mubr.bf16.gmra.mrb[0].mxu0 %v1655
        %v1712 = vpop.f32.mrb[0].mxu0
        %v1713 = vadd.f32 0.0, %v1712
        %v1714 = vpop.f32.mrb[0].mxu0
        %v1715 = vpop.f32.mrb[0].mxu0
        %v1716 = vadd.f32 0.0, %v1715
        %v1717 = vpop.f32.mrb[0].mxu0
        %1718 = vmatprep.mubr.bf16.mxu0 0
        %1719 = vmatmul.mubr.bf16.gmra.mrb[0].mxu0 %v1658
        %v1720 = vpop.f32.mrb[0].mxu0
        %v1721 = vadd.f32 0.0, %v1720
        %v1722 = vpop.f32.mrb[0].mxu0
        %v1723 = vpop.f32.mrb[0].mxu0
        %v1724 = vadd.f32 0.0, %v1723
        %v1725 = vpop.f32.mrb[0].mxu0
        %1726 = vmatprep.mubr.bf16.mxu0 0
        %1727 = vmatmul.mubr.bf16.gmra.mrb[0].mxu0 %v1661
        %v1728 = vpop.f32.mrb[0].mxu0
        %v1729 = vadd.f32 0.0, %v1728
        %v1730 = vpop.f32.mrb[0].mxu0
        %v1731 = vpop.f32.mrb[0].mxu0
        %v1732 = vadd.f32 0.0, %v1731
        %v1733 = vpop.f32.mrb[0].mxu0
        %1734 = vmatprep.mubr.bf16.mxu0 0
        %1735 = vmatmul.mubr.bf16.gmra.mrb[0].mxu0 %v1664
        %v1736 = vpop.f32.mrb[0].mxu0
        %v1737 = vadd.f32 0.0, %v1736
        %v1738 = vpop.f32.mrb[0].mxu0
        %v1739 = vpop.f32.mrb[0].mxu0
        %v1740 = vadd.f32 0.0, %v1739
        %v1741 = vpop.f32.mrb[0].mxu0
        %1742 = vmatprep.mubr.bf16.mxu0 0
        %1743 = vmatmul.mubr.bf16.gmra.mrb[0].mxu0 %v1667
        %v1744 = vpop.f32.mrb[0].mxu0
        %v1745 = vadd.f32 0.0, %v1744
        %v1746 = vpop.f32.mrb[0].mxu0
        %v1747 = vpop.f32.mrb[0].mxu0
        %v1748 = vadd.f32 0.0, %v1747
        %v1749 = vpop.f32.mrb[0].mxu0
        %1750 = vmatprep.mubr.bf16.mxu0 0
        %1751 = vmatmul.mubr.bf16.gmra.mrb[0].mxu0 %v1670
        %v1752 = vpop.f32.mrb[0].mxu0
        %v1753 = vadd.f32 0.0, %v1752
        %v1754 = vpop.f32.mrb[0].mxu0
        %v1755 = vpop.f32.mrb[0].mxu0
        %v1756 = vadd.f32 0.0, %v1755
        %v1757 = vpop.f32.mrb[0].mxu0
        %1758 = vmatprep.mubr.bf16.mxu0 0
        %1759 = vmatmul.mubr.bf16.gmra.mrb[0].mxu0 %v1673
        %v1760 = vpop.f32.mrb[0].mxu0
        %v1761 = vadd.f32 0.0, %v1760
        %v1762 = vpop.f32.mrb[0].mxu0
        %v1763 = vpop.f32.mrb[0].mxu0
        %v1764 = vadd.f32 0.0, %v1763
        %v1765 = vpop.f32.mrb[0].mxu0
        %1766 = vmatprep.mubr.bf16.mxu0 0
        %1767 = vmatmul.mubr.bf16.gmra.mrb[0].mxu0 %v1676
        %v1768 = vpop.f32.mrb[0].mxu0
        %v1769 = vadd.f32 0.0, %v1768
        %v1770 = vpop.f32.mrb[0].mxu0
        %v1771 = vpop.f32.mrb[0].mxu0
        %v1772 = vadd.f32 0.0, %v1771
        %v1773 = vpop.f32.mrb[0].mxu0
        %1774 = vdwg.mxu0
        %v1775 = vpack.c.bf16 %v1716, %v1713
        %v1776 = vpack.c.bf16 %v1724, %v1721
        %v1777 = vpack.c.bf16 %v1732, %v1729
        %v1778 = vpack.c.bf16 %v1740, %v1737
        %v1779 = vpack.c.bf16 %v1748, %v1745
        %v1780 = vpack.c.bf16 %v1756, %v1753
        %v1781 = vpack.c.bf16 %v1764, %v1761
        %v1782 = vpack.c.bf16 %v1772, %v1769
        %v1783 = vsub.bf16 0, %v1301
        %v1784 = vsub.bf16 0, %v1302
        %v1785 = vsub.bf16 0, %v1303
        %v1786 = vsub.bf16 0, %v1304
        %v1791 = vunpack.c.l.b16 %v1783
        %v1792 = vunpack.c.l.b16 %v1784
        %v1793 = vunpack.c.l.b16 %v1785
        %v1794 = vunpack.c.l.b16 %v1786
        %v1795 = vpack.c.b16 %v1792, %v1791
        %v1796 = vpack.c.b16 %v1794, %v1793
        %v1799 = vsub.bf16 0, %v1297
        %v1800 = vsub.bf16 0, %v1298
        %v1801 = vsub.bf16 0, %v1299
        %v1802 = vsub.bf16 0, %v1300
        %v1807 = vunpack.c.l.b16 %v1799
        %v1808 = vunpack.c.l.b16 %v1800
        %v1809 = vunpack.c.l.b16 %v1801
        %v1810 = vunpack.c.l.b16 %v1802
        %v1811 = vpack.c.b16 %v1808, %v1807
        %v1812 = vpack.c.b16 %v1810, %v1809
        %v1817 = vcombine.low %v1305, %v1306
        %v1819 = vunpack.c.l.s4 1966171168
        %v1820 = vunpack.c.0.s8 %v1819
        %v1821 = vlaneseq
        %v1822 = vshrl.u32 %v1821, 7
        %v1823 = vsub.s32 %v1820, %v1822
        %v1824 = vrot.slane %v1817, %v1823
        %v1825 = vcombine.high %v1824, %v1824
        %v1827 = vunpack.c.l.s4 1966171168
        %v1828 = vunpack.c.0.s8 %v1827
        %v1829 = vlaneseq
        %v1830 = vshrl.u32 %v1829, 7
        %v1831 = vsub.s32 %v1828, %v1830
        %v1832 = vrot.slane %v1824, %v1831
        %v1834 = vunpack.c.l.s4 1966171168
        %v1835 = vunpack.c.0.s8 %v1834
        %v1836 = vlaneseq
        %v1837 = vshrl.u32 %v1836, 7
        %v1838 = vsub.s32 %v1835, %v1837
        %v1839 = vrot.slane %v1825, %v1838
        %v1840 = vcombine.high %v1832, %v1832
        %v1841 = vunpack.i.l.s16 %v1832
        %v1842 = vunpack.i.h.s16 %v1832
        %v1843 = vunpack.i.l.s16 %v1839
        %v1844 = vunpack.i.h.s16 %v1839
        %v1845 = vunpack.i.l.s16 %v1840
        %v1846 = vunpack.i.h.s16 %v1840
        %v1847 = vpack.i.b16 %v1841, %v1841
        %v1848 = vpack.i.b16 %v1842, %v1842
        %v1849 = vpack.i.b16 %v1843, %v1843
        %v1850 = vpack.i.b16 %v1844, %v1844
        %v1851 = vpack.i.b16 %v1845, %v1845
        %v1852 = vpack.i.b16 %v1846, %v1846
        %v1853 = vlaneseq
        %v1854 = vshrl.u32 %v1853, 7
        %v1855 = vsub.s32 0, %v1854
        %v1856 = vrot.slane %v1847, %v1855
        %v1857 = vlaneseq
        %v1858 = vshrl.u32 %v1857, 7
        %v1859 = vsub.s32 1, %v1858
        %v1860 = vrot.slane %v1847, %v1859
        %v1861 = vlaneseq
        %v1862 = vshrl.u32 %v1861, 7
        %v1863 = vsub.s32 0, %v1862
        %v1864 = vrot.slane %v1848, %v1863
        %v1865 = vlaneseq
        %v1866 = vshrl.u32 %v1865, 7
        %v1867 = vsub.s32 1, %v1866
        %v1868 = vrot.slane %v1848, %v1867
        %v1869 = vlaneseq
        %v1870 = vshrl.u32 %v1869, 7
        %v1871 = vsub.s32 0, %v1870
        %v1872 = vrot.slane %v1849, %v1871
        %v1873 = vlaneseq
        %v1874 = vshrl.u32 %v1873, 7
        %v1875 = vsub.s32 1, %v1874
        %v1876 = vrot.slane %v1849, %v1875
        %v1877 = vlaneseq
        %v1878 = vshrl.u32 %v1877, 7
        %v1879 = vsub.s32 0, %v1878
        %v1880 = vrot.slane %v1850, %v1879
        %v1881 = vlaneseq
        %v1882 = vshrl.u32 %v1881, 7
        %v1883 = vsub.s32 1, %v1882
        %v1884 = vrot.slane %v1850, %v1883
        %v1885 = vlaneseq
        %v1886 = vshrl.u32 %v1885, 7
        %v1887 = vsub.s32 0, %v1886
        %v1888 = vrot.slane %v1851, %v1887
        %v1889 = vlaneseq
        %v1890 = vshrl.u32 %v1889, 7
        %v1891 = vsub.s32 1, %v1890
        %v1892 = vrot.slane %v1851, %v1891
        %v1893 = vlaneseq
        %v1894 = vshrl.u32 %v1893, 7
        %v1895 = vsub.s32 0, %v1894
        %v1896 = vrot.slane %v1852, %v1895
        %v1897 = vlaneseq
        %v1898 = vshrl.u32 %v1897, 7
        %v1899 = vsub.s32 1, %v1898
        %v1900 = vrot.slane %v1852, %v1899
        %v1902 = vpack.i.b16 %v1856, %v1856
        %v1904 = vlaneseq
        %v1905 = vshrl.u32 %v1904, 7
        %v1906 = vsub.s32 0, %v1905
        %v1907 = vrot.slane %v1902, %v1906
        %v1909 = vpack.i.b16 %v1860, %v1860
        %v1911 = vlaneseq
        %v1912 = vshrl.u32 %v1911, 7
        %v1913 = vsub.s32 0, %v1912
        %v1914 = vrot.slane %v1909, %v1913
        %v1916 = vpack.i.b16 %v1864, %v1864
        %v1918 = vlaneseq
        %v1919 = vshrl.u32 %v1918, 7
        %v1920 = vsub.s32 0, %v1919
        %v1921 = vrot.slane %v1916, %v1920
        %v1923 = vpack.i.b16 %v1868, %v1868
        %v1925 = vlaneseq
        %v1926 = vshrl.u32 %v1925, 7
        %v1927 = vsub.s32 0, %v1926
        %v1928 = vrot.slane %v1923, %v1927
        %v1930 = vpack.i.b16 %v1872, %v1872
        %v1932 = vlaneseq
        %v1933 = vshrl.u32 %v1932, 7
        %v1934 = vsub.s32 0, %v1933
        %v1935 = vrot.slane %v1930, %v1934
        %v1937 = vpack.i.b16 %v1876, %v1876
        %v1939 = vlaneseq
        %v1940 = vshrl.u32 %v1939, 7
        %v1941 = vsub.s32 0, %v1940
        %v1942 = vrot.slane %v1937, %v1941
        %v1944 = vpack.i.b16 %v1880, %v1880
        %v1946 = vlaneseq
        %v1947 = vshrl.u32 %v1946, 7
        %v1948 = vsub.s32 0, %v1947
        %v1949 = vrot.slane %v1944, %v1948
        %v1951 = vpack.i.b16 %v1884, %v1884
        %v1953 = vlaneseq
        %v1954 = vshrl.u32 %v1953, 7
        %v1955 = vsub.s32 0, %v1954
        %v1956 = vrot.slane %v1951, %v1955
        %v1958 = vpack.i.b16 %v1888, %v1888
        %v1960 = vlaneseq
        %v1961 = vshrl.u32 %v1960, 7
        %v1962 = vsub.s32 0, %v1961
        %v1963 = vrot.slane %v1958, %v1962
        %v1965 = vpack.i.b16 %v1892, %v1892
        %v1967 = vlaneseq
        %v1968 = vshrl.u32 %v1967, 7
        %v1969 = vsub.s32 0, %v1968
        %v1970 = vrot.slane %v1965, %v1969
        %v1972 = vpack.i.b16 %v1896, %v1896
        %v1974 = vlaneseq
        %v1975 = vshrl.u32 %v1974, 7
        %v1976 = vsub.s32 0, %v1975
        %v1977 = vrot.slane %v1972, %v1976
        %v1979 = vpack.i.b16 %v1900, %v1900
        %v1981 = vlaneseq
        %v1982 = vshrl.u32 %v1981, 7
        %v1983 = vsub.s32 0, %v1982
        %v1984 = vrot.slane %v1979, %v1983
        %v1985 = vmul.bf16 %v1907, %v1374
        %v1986 = vmul.bf16 %v1914, %v1795
        %v1987 = vmul.bf16 %v1907, %v1375
        %v1988 = vmul.bf16 %v1914, %v1796
        %v1989 = vmul.bf16 %v1921, %v1374
        %v1990 = vmul.bf16 %v1928, %v1795
        %v1991 = vmul.bf16 %v1921, %v1375
        %v1992 = vmul.bf16 %v1928, %v1796
        %v1993 = vmul.bf16 %v1935, %v1374
        %v1994 = vmul.bf16 %v1942, %v1795
        %v1995 = vmul.bf16 %v1935, %v1375
        %v1996 = vmul.bf16 %v1942, %v1796
        %v1997 = vmul.bf16 %v1949, %v1374
        %v1998 = vmul.bf16 %v1956, %v1795
        %v1999 = vmul.bf16 %v1949, %v1375
        %v2000 = vmul.bf16 %v1956, %v1796
        %v2001 = vmul.bf16 %v1963, %v1374
        %v2002 = vmul.bf16 %v1970, %v1795
        %v2003 = vmul.bf16 %v1963, %v1375
        %v2004 = vmul.bf16 %v1970, %v1796
        %v2005 = vmul.bf16 %v1977, %v1374
        %v2006 = vmul.bf16 %v1984, %v1795
        %v2007 = vmul.bf16 %v1977, %v1375
        %v2008 = vmul.bf16 %v1984, %v1796
        %v2009 = vcombine.low %v1306, %v1305
        %v2011 = vunpack.c.l.s4 1966171168
        %v2012 = vunpack.c.0.s8 %v2011
        %v2013 = vlaneseq
        %v2014 = vshrl.u32 %v2013, 7
        %v2015 = vsub.s32 %v2012, %v2014
        %v2016 = vrot.slane %v2009, %v2015
        %v2017 = vcombine.high %v2016, %v2016
        %v2019 = vunpack.c.l.s4 1966171168
        %v2020 = vunpack.c.0.s8 %v2019
        %v2021 = vlaneseq
        %v2022 = vshrl.u32 %v2021, 7
        %v2023 = vsub.s32 %v2020, %v2022
        %v2024 = vrot.slane %v2016, %v2023
        %v2026 = vunpack.c.l.s4 1966171168
        %v2027 = vunpack.c.0.s8 %v2026
        %v2028 = vlaneseq
        %v2029 = vshrl.u32 %v2028, 7
        %v2030 = vsub.s32 %v2027, %v2029
        %v2031 = vrot.slane %v2017, %v2030
        %v2032 = vcombine.high %v2024, %v2024
        %v2033 = vunpack.i.l.s16 %v2024
        %v2034 = vunpack.i.h.s16 %v2024
        %v2035 = vunpack.i.l.s16 %v2031
        %v2036 = vunpack.i.h.s16 %v2031
        %v2037 = vunpack.i.l.s16 %v2032
        %v2038 = vunpack.i.h.s16 %v2032
        %v2039 = vpack.i.b16 %v2033, %v2033
        %v2040 = vpack.i.b16 %v2034, %v2034
        %v2041 = vpack.i.b16 %v2035, %v2035
        %v2042 = vpack.i.b16 %v2036, %v2036
        %v2043 = vpack.i.b16 %v2037, %v2037
        %v2044 = vpack.i.b16 %v2038, %v2038
        %v2045 = vlaneseq
        %v2046 = vshrl.u32 %v2045, 7
        %v2047 = vsub.s32 0, %v2046
        %v2048 = vrot.slane %v2039, %v2047
        %v2049 = vlaneseq
        %v2050 = vshrl.u32 %v2049, 7
        %v2051 = vsub.s32 1, %v2050
        %v2052 = vrot.slane %v2039, %v2051
        %v2053 = vlaneseq
        %v2054 = vshrl.u32 %v2053, 7
        %v2055 = vsub.s32 0, %v2054
        %v2056 = vrot.slane %v2040, %v2055
        %v2057 = vlaneseq
        %v2058 = vshrl.u32 %v2057, 7
        %v2059 = vsub.s32 1, %v2058
        %v2060 = vrot.slane %v2040, %v2059
        %v2061 = vlaneseq
        %v2062 = vshrl.u32 %v2061, 7
        %v2063 = vsub.s32 0, %v2062
        %v2064 = vrot.slane %v2041, %v2063
        %v2065 = vlaneseq
        %v2066 = vshrl.u32 %v2065, 7
        %v2067 = vsub.s32 1, %v2066
        %v2068 = vrot.slane %v2041, %v2067
        %v2069 = vlaneseq
        %v2070 = vshrl.u32 %v2069, 7
        %v2071 = vsub.s32 0, %v2070
        %v2072 = vrot.slane %v2042, %v2071
        %v2073 = vlaneseq
        %v2074 = vshrl.u32 %v2073, 7
        %v2075 = vsub.s32 1, %v2074
        %v2076 = vrot.slane %v2042, %v2075
        %v2077 = vlaneseq
        %v2078 = vshrl.u32 %v2077, 7
        %v2079 = vsub.s32 0, %v2078
        %v2080 = vrot.slane %v2043, %v2079
        %v2081 = vlaneseq
        %v2082 = vshrl.u32 %v2081, 7
        %v2083 = vsub.s32 1, %v2082
        %v2084 = vrot.slane %v2043, %v2083
        %v2085 = vlaneseq
        %v2086 = vshrl.u32 %v2085, 7
        %v2087 = vsub.s32 0, %v2086
        %v2088 = vrot.slane %v2044, %v2087
        %v2089 = vlaneseq
        %v2090 = vshrl.u32 %v2089, 7
        %v2091 = vsub.s32 1, %v2090
        %v2092 = vrot.slane %v2044, %v2091
        %v2094 = vpack.i.b16 %v2048, %v2048
        %v2096 = vlaneseq
        %v2097 = vshrl.u32 %v2096, 7
        %v2098 = vsub.s32 0, %v2097
        %v2099 = vrot.slane %v2094, %v2098
        %v2101 = vpack.i.b16 %v2052, %v2052
        %v2103 = vlaneseq
        %v2104 = vshrl.u32 %v2103, 7
        %v2105 = vsub.s32 0, %v2104
        %v2106 = vrot.slane %v2101, %v2105
        %v2108 = vpack.i.b16 %v2056, %v2056
        %v2110 = vlaneseq
        %v2111 = vshrl.u32 %v2110, 7
        %v2112 = vsub.s32 0, %v2111
        %v2113 = vrot.slane %v2108, %v2112
        %v2115 = vpack.i.b16 %v2060, %v2060
        %v2117 = vlaneseq
        %v2118 = vshrl.u32 %v2117, 7
        %v2119 = vsub.s32 0, %v2118
        %v2120 = vrot.slane %v2115, %v2119
        %v2122 = vpack.i.b16 %v2064, %v2064
        %v2124 = vlaneseq
        %v2125 = vshrl.u32 %v2124, 7
        %v2126 = vsub.s32 0, %v2125
        %v2127 = vrot.slane %v2122, %v2126
        %v2129 = vpack.i.b16 %v2068, %v2068
        %v2131 = vlaneseq
        %v2132 = vshrl.u32 %v2131, 7
        %v2133 = vsub.s32 0, %v2132
        %v2134 = vrot.slane %v2129, %v2133
        %v2136 = vpack.i.b16 %v2072, %v2072
        %v2138 = vlaneseq
        %v2139 = vshrl.u32 %v2138, 7
        %v2140 = vsub.s32 0, %v2139
        %v2141 = vrot.slane %v2136, %v2140
        %v2143 = vpack.i.b16 %v2076, %v2076
        %v2145 = vlaneseq
        %v2146 = vshrl.u32 %v2145, 7
        %v2147 = vsub.s32 0, %v2146
        %v2148 = vrot.slane %v2143, %v2147
        %v2150 = vpack.i.b16 %v2080, %v2080
        %v2152 = vlaneseq
        %v2153 = vshrl.u32 %v2152, 7
        %v2154 = vsub.s32 0, %v2153
        %v2155 = vrot.slane %v2150, %v2154
        %v2157 = vpack.i.b16 %v2084, %v2084
        %v2159 = vlaneseq
        %v2160 = vshrl.u32 %v2159, 7
        %v2161 = vsub.s32 0, %v2160
        %v2162 = vrot.slane %v2157, %v2161
        %v2164 = vpack.i.b16 %v2088, %v2088
        %v2166 = vlaneseq
        %v2167 = vshrl.u32 %v2166, 7
        %v2168 = vsub.s32 0, %v2167
        %v2169 = vrot.slane %v2164, %v2168
        %v2171 = vpack.i.b16 %v2092, %v2092
        %v2173 = vlaneseq
        %v2174 = vshrl.u32 %v2173, 7
        %v2175 = vsub.s32 0, %v2174
        %v2176 = vrot.slane %v2171, %v2175
        %v2177 = vmul.bf16 %v2099, %v1443
        %v2178 = vmul.bf16 %v2106, %v1811
        %v2179 = vmul.bf16 %v2099, %v1444
        %v2180 = vmul.bf16 %v2106, %v1812
        %v2181 = vmul.bf16 %v2113, %v1443
        %v2182 = vmul.bf16 %v2120, %v1811
        %v2183 = vmul.bf16 %v2113, %v1444
        %v2184 = vmul.bf16 %v2120, %v1812
        %v2185 = vmul.bf16 %v2127, %v1443
        %v2186 = vmul.bf16 %v2134, %v1811
        %v2187 = vmul.bf16 %v2127, %v1444
        %v2188 = vmul.bf16 %v2134, %v1812
        %v2189 = vmul.bf16 %v2141, %v1443
        %v2190 = vmul.bf16 %v2148, %v1811
        %v2191 = vmul.bf16 %v2141, %v1444
        %v2192 = vmul.bf16 %v2148, %v1812
        %v2193 = vmul.bf16 %v2155, %v1443
        %v2194 = vmul.bf16 %v2162, %v1811
        %v2195 = vmul.bf16 %v2155, %v1444
        %v2196 = vmul.bf16 %v2162, %v1812
        %v2197 = vmul.bf16 %v2169, %v1443
        %v2198 = vmul.bf16 %v2176, %v1811
        %v2199 = vmul.bf16 %v2169, %v1444
        %v2200 = vmul.bf16 %v2176, %v1812
        %2217 = vmatprep.subr.bf16.mxu0 0
        %2218 = vmatpush1.bf16.msra.mxu0 %v1646
        %2219 = vmatprep.subr.bf16.mxu0 0
        %2220 = vmatpush1.bf16.msra.mxu0 %v1647
        %2221 = vmatprep.subr.bf16.mxu0 0
        %2222 = vmatpush1.bf16.msra.mxu0 %v1648
        %2223 = vmatprep.subr.bf16.mxu0 0
        %2224 = vmatpush1.bf16.msra.mxu0 %v1649
        %2225 = vmatprep.subr.bf16.mxu0 0
        %2226 = vmatpush1.bf16.msra.mxu0 %v1650
        %2227 = vmatprep.subr.bf16.mxu0 0
        %2228 = vmatpush1.bf16.msra.mxu0 %v1651
        %2229 = vmatprep.subr.bf16.mxu0 0
        %2230 = vmatpush1.bf16.msra.mxu0 %v1652
        %2231 = vmatprep.subr.bf16.mxu0 0
        %2232 = vmatpush1.bf16.msra.mxu0 %v1653
        %2233 = vmatprep.subr.bf16.mxu0 0
        %2234 = vmatpush1.bf16.msra.mxu0 %v1606
        %2235 = vmatprep.subr.bf16.mxu0 0
        %2236 = vmatpush1.bf16.msra.mxu0 %v1607
        %2237 = vmatprep.subr.bf16.mxu0 0
        %2238 = vmatpush1.bf16.msra.mxu0 %v1608
        %2239 = vmatprep.subr.bf16.mxu0 0
        %2240 = vmatpush1.bf16.msra.mxu0 %v1609
        %2241 = vmatprep.subr.bf16.mxu0 0
        %2242 = vmatpush1.bf16.msra.mxu0 %v1610
        %2243 = vmatprep.subr.bf16.mxu0 0
        %2244 = vmatpush1.bf16.msra.mxu0 %v1611
        %2245 = vmatprep.subr.bf16.mxu0 0
        %2246 = vmatpush1.bf16.msra.mxu0 %v1612
        %2247 = vmatprep.subr.bf16.mxu0 0
        %2248 = vmatpush1.bf16.msra.mxu0 %v1613
        %2249 = vmatprep.mubr.bf16.mxu0 %v1986
        %2250 = vmatmul.mubr.bf16.gmra.mrb[0].mxu0 %v1985
        %v2251 = vpop.f32.mrb[0].mxu0
        %v2252 = vadd.f32 0.0, %v2251
        %v2253 = vpop.f32.mrb[0].mxu0
        %v2254 = vpop.f32.mrb[0].mxu0
        %v2255 = vadd.f32 0.0, %v2254
        %v2256 = vpop.f32.mrb[0].mxu0
        %2257 = vmatprep.mubr.bf16.mxu0 %v1988
        %2258 = vmatmul.mubr.bf16.gmra.mrb[0].mxu0 %v1987
        %v2259 = vpop.f32.mrb[0].mxu0
        %v2260 = vadd.f32 0.0, %v2259
        %v2261 = vpop.f32.mrb[0].mxu0
        %v2262 = vpop.f32.mrb[0].mxu0
        %v2263 = vadd.f32 0.0, %v2262
        %v2264 = vpop.f32.mrb[0].mxu0
        %2265 = vmatprep.mubr.bf16.mxu0 %v1990
        %2266 = vmatmul.mubr.bf16.gmra.mrb[0].mxu0 %v1989
        %v2267 = vpop.f32.mrb[0].mxu0
        %v2268 = vadd.f32 0.0, %v2267
        %v2269 = vpop.f32.mrb[0].mxu0
        %v2270 = vpop.f32.mrb[0].mxu0
        %v2271 = vadd.f32 0.0, %v2270
        %v2272 = vpop.f32.mrb[0].mxu0
        %2273 = vmatprep.mubr.bf16.mxu0 %v1992
        %2274 = vmatmul.mubr.bf16.gmra.mrb[0].mxu0 %v1991
        %v2275 = vpop.f32.mrb[0].mxu0
        %v2276 = vadd.f32 0.0, %v2275
        %v2277 = vpop.f32.mrb[0].mxu0
        %v2278 = vpop.f32.mrb[0].mxu0
        %v2279 = vadd.f32 0.0, %v2278
        %v2280 = vpop.f32.mrb[0].mxu0
        %2281 = vmatprep.mubr.bf16.mxu0 %v1994
        %2282 = vmatmul.mubr.bf16.gmra.mrb[0].mxu0 %v1993
        %v2283 = vpop.f32.mrb[0].mxu0
        %v2284 = vadd.f32 0.0, %v2283
        %v2285 = vpop.f32.mrb[0].mxu0
        %v2286 = vpop.f32.mrb[0].mxu0
        %v2287 = vadd.f32 0.0, %v2286
        %v2288 = vpop.f32.mrb[0].mxu0
        %2289 = vmatprep.mubr.bf16.mxu0 %v1996
        %2290 = vmatmul.mubr.bf16.gmra.mrb[0].mxu0 %v1995
        %v2291 = vpop.f32.mrb[0].mxu0
        %v2292 = vadd.f32 0.0, %v2291
        %v2293 = vpop.f32.mrb[0].mxu0
        %v2294 = vpop.f32.mrb[0].mxu0
        %v2295 = vadd.f32 0.0, %v2294
        %v2296 = vpop.f32.mrb[0].mxu0
        %2297 = vmatprep.mubr.bf16.mxu0 %v1998
        %2298 = vmatmul.mubr.bf16.gmra.mrb[0].mxu0 %v1997
        %v2299 = vpop.f32.mrb[0].mxu0
        %v2300 = vadd.f32 0.0, %v2299
        %v2301 = vpop.f32.mrb[0].mxu0
        %v2302 = vpop.f32.mrb[0].mxu0
        %v2303 = vadd.f32 0.0, %v2302
        %v2304 = vpop.f32.mrb[0].mxu0
        %2305 = vmatprep.mubr.bf16.mxu0 %v2000
        %2306 = vmatmul.mubr.bf16.gmra.mrb[0].mxu0 %v1999
        %v2307 = vpop.f32.mrb[0].mxu0
        %v2308 = vadd.f32 0.0, %v2307
        %v2309 = vpop.f32.mrb[0].mxu0
        %v2310 = vpop.f32.mrb[0].mxu0
        %v2311 = vadd.f32 0.0, %v2310
        %v2312 = vpop.f32.mrb[0].mxu0
        %2313 = vmatprep.mubr.bf16.mxu0 %v2002
        %2314 = vmatmul.mubr.bf16.gmra.mrb[0].mxu0 %v2001
        %v2315 = vpop.f32.mrb[0].mxu0
        %v2316 = vadd.f32 0.0, %v2315
        %v2317 = vpop.f32.mrb[0].mxu0
        %v2318 = vpop.f32.mrb[0].mxu0
        %v2319 = vadd.f32 0.0, %v2318
        %v2320 = vpop.f32.mrb[0].mxu0
        %2321 = vmatprep.mubr.bf16.mxu0 %v2004
        %2322 = vmatmul.mubr.bf16.gmra.mrb[0].mxu0 %v2003
        %v2323 = vpop.f32.mrb[0].mxu0
        %v2324 = vadd.f32 0.0, %v2323
        %v2325 = vpop.f32.mrb[0].mxu0
        %v2326 = vpop.f32.mrb[0].mxu0
        %v2327 = vadd.f32 0.0, %v2326
        %v2328 = vpop.f32.mrb[0].mxu0
        %2329 = vmatprep.mubr.bf16.mxu0 %v2006
        %2330 = vmatmul.mubr.bf16.gmra.mrb[0].mxu0 %v2005
        %v2331 = vpop.f32.mrb[0].mxu0
        %v2332 = vadd.f32 0.0, %v2331
        %v2333 = vpop.f32.mrb[0].mxu0
        %v2334 = vpop.f32.mrb[0].mxu0
        %v2335 = vadd.f32 0.0, %v2334
        %v2336 = vpop.f32.mrb[0].mxu0
        %2337 = vmatprep.mubr.bf16.mxu0 %v2008
        %2338 = vmatmul.mubr.bf16.gmra.mrb[0].mxu0 %v2007
        %v2339 = vpop.f32.mrb[0].mxu0
        %v2340 = vadd.f32 0.0, %v2339
        %v2341 = vpop.f32.mrb[0].mxu0
        %v2342 = vpop.f32.mrb[0].mxu0
        %v2343 = vadd.f32 0.0, %v2342
        %v2344 = vpop.f32.mrb[0].mxu0
        %2345 = vdwg.mxu0
        %2346 = vmatprep.subr.bf16.mxu0 0
        %2347 = vmatpush1.bf16.msra.mxu0 %v1477
        %2348 = vmatprep.subr.bf16.mxu0 0
        %2349 = vmatpush1.bf16.msra.mxu0 %v1478
        %2350 = vmatprep.subr.bf16.mxu0 0
        %2351 = vmatpush1.bf16.msra.mxu0 %v1479
        %2352 = vmatprep.subr.bf16.mxu0 0
        %2353 = vmatpush1.bf16.msra.mxu0 %v1480
        %2354 = vmatprep.subr.bf16.mxu0 0
        %2355 = vmatpush1.bf16.msra.mxu0 %v1481
        %2356 = vmatprep.subr.bf16.mxu0 0
        %2357 = vmatpush1.bf16.msra.mxu0 %v1482
        %2358 = vmatprep.subr.bf16.mxu0 0
        %2359 = vmatpush1.bf16.msra.mxu0 %v1483
        %2360 = vmatprep.subr.bf16.mxu0 0
        %2361 = vmatpush1.bf16.msra.mxu0 %v1484
        %2362 = vmatprep.subr.bf16.mxu0 0
        %2363 = vmatpush1.bf16.msra.mxu0 %v1775
        %2364 = vmatprep.subr.bf16.mxu0 0
        %2365 = vmatpush1.bf16.msra.mxu0 %v1776
        %2366 = vmatprep.subr.bf16.mxu0 0
        %2367 = vmatpush1.bf16.msra.mxu0 %v1777
        %2368 = vmatprep.subr.bf16.mxu0 0
        %2369 = vmatpush1.bf16.msra.mxu0 %v1778
        %2370 = vmatprep.subr.bf16.mxu0 0
        %2371 = vmatpush1.bf16.msra.mxu0 %v1779
        %2372 = vmatprep.subr.bf16.mxu0 0
        %2373 = vmatpush1.bf16.msra.mxu0 %v1780
        %2374 = vmatprep.subr.bf16.mxu0 0
        %2375 = vmatpush1.bf16.msra.mxu0 %v1781
        %2376 = vmatprep.subr.bf16.mxu0 0
        %2377 = vmatpush1.bf16.msra.mxu0 %v1782
        %2378 = vmatprep.mubr.bf16.mxu0 %v2178
        %2379 = vmatmul.mubr.bf16.gmra.mrb[0].mxu0 %v2177
        %v2380 = vpop.f32.mrb[0].mxu0
        %v2381 = vadd.f32 0.0, %v2380
        %v2382 = vpop.f32.mrb[0].mxu0
        %v2383 = vpop.f32.mrb[0].mxu0
        %v2384 = vadd.f32 0.0, %v2383
        %v2385 = vpop.f32.mrb[0].mxu0
        %2386 = vmatprep.mubr.bf16.mxu0 %v2180
        %2387 = vmatmul.mubr.bf16.gmra.mrb[0].mxu0 %v2179
        %v2388 = vpop.f32.mrb[0].mxu0
        %v2389 = vadd.f32 0.0, %v2388
        %v2390 = vpop.f32.mrb[0].mxu0
        %v2391 = vpop.f32.mrb[0].mxu0
        %v2392 = vadd.f32 0.0, %v2391
        %v2393 = vpop.f32.mrb[0].mxu0
        %2394 = vmatprep.mubr.bf16.mxu0 %v2182
        %2395 = vmatmul.mubr.bf16.gmra.mrb[0].mxu0 %v2181
        %v2396 = vpop.f32.mrb[0].mxu0
        %v2397 = vadd.f32 0.0, %v2396
        %v2398 = vpop.f32.mrb[0].mxu0
        %v2399 = vpop.f32.mrb[0].mxu0
        %v2400 = vadd.f32 0.0, %v2399
        %v2401 = vpop.f32.mrb[0].mxu0
        %2402 = vmatprep.mubr.bf16.mxu0 %v2184
        %2403 = vmatmul.mubr.bf16.gmra.mrb[0].mxu0 %v2183
        %v2404 = vpop.f32.mrb[0].mxu0
        %v2405 = vadd.f32 0.0, %v2404
        %v2406 = vpop.f32.mrb[0].mxu0
        %v2407 = vpop.f32.mrb[0].mxu0
        %v2408 = vadd.f32 0.0, %v2407
        %v2409 = vpop.f32.mrb[0].mxu0
        %2410 = vmatprep.mubr.bf16.mxu0 %v2186
        %2411 = vmatmul.mubr.bf16.gmra.mrb[0].mxu0 %v2185
        %v2412 = vpop.f32.mrb[0].mxu0
        %v2413 = vadd.f32 0.0, %v2412
        %v2414 = vpop.f32.mrb[0].mxu0
        %v2415 = vpop.f32.mrb[0].mxu0
        %v2416 = vadd.f32 0.0, %v2415
        %v2417 = vpop.f32.mrb[0].mxu0
        %2418 = vmatprep.mubr.bf16.mxu0 %v2188
        %2419 = vmatmul.mubr.bf16.gmra.mrb[0].mxu0 %v2187
        %v2420 = vpop.f32.mrb[0].mxu0
        %v2421 = vadd.f32 0.0, %v2420
        %v2422 = vpop.f32.mrb[0].mxu0
        %v2423 = vpop.f32.mrb[0].mxu0
        %v2424 = vadd.f32 0.0, %v2423
        %v2425 = vpop.f32.mrb[0].mxu0
        %2426 = vmatprep.mubr.bf16.mxu0 %v2190
        %2427 = vmatmul.mubr.bf16.gmra.mrb[0].mxu0 %v2189
        %v2428 = vpop.f32.mrb[0].mxu0
        %v2429 = vadd.f32 0.0, %v2428
        %v2430 = vpop.f32.mrb[0].mxu0
        %v2431 = vpop.f32.mrb[0].mxu0
        %v2432 = vadd.f32 0.0, %v2431
        %v2433 = vpop.f32.mrb[0].mxu0
        %2434 = vmatprep.mubr.bf16.mxu0 %v2192
        %2435 = vmatmul.mubr.bf16.gmra.mrb[0].mxu0 %v2191
        %v2436 = vpop.f32.mrb[0].mxu0
        %v2437 = vadd.f32 0.0, %v2436
        %v2438 = vpop.f32.mrb[0].mxu0
        %v2439 = vpop.f32.mrb[0].mxu0
        %v2440 = vadd.f32 0.0, %v2439
        %v2441 = vpop.f32.mrb[0].mxu0
        %2442 = vmatprep.mubr.bf16.mxu0 %v2194
        %2443 = vmatmul.mubr.bf16.gmra.mrb[0].mxu0 %v2193
        %v2444 = vpop.f32.mrb[0].mxu0
        %v2445 = vadd.f32 0.0, %v2444
        %v2446 = vpop.f32.mrb[0].mxu0
        %v2447 = vpop.f32.mrb[0].mxu0
        %v2448 = vadd.f32 0.0, %v2447
        %v2449 = vpop.f32.mrb[0].mxu0
        %2450 = vmatprep.mubr.bf16.mxu0 %v2196
        %2451 = vmatmul.mubr.bf16.gmra.mrb[0].mxu0 %v2195
        %v2452 = vpop.f32.mrb[0].mxu0
        %v2453 = vadd.f32 0.0, %v2452
        %v2454 = vpop.f32.mrb[0].mxu0
        %v2455 = vpop.f32.mrb[0].mxu0
        %v2456 = vadd.f32 0.0, %v2455
        %v2457 = vpop.f32.mrb[0].mxu0
        %2458 = vmatprep.mubr.bf16.mxu0 %v2198
        %2459 = vmatmul.mubr.bf16.gmra.mrb[0].mxu0 %v2197
        %v2460 = vpop.f32.mrb[0].mxu0
        %v2461 = vadd.f32 0.0, %v2460
        %v2462 = vpop.f32.mrb[0].mxu0
        %v2463 = vpop.f32.mrb[0].mxu0
        %v2464 = vadd.f32 0.0, %v2463
        %v2465 = vpop.f32.mrb[0].mxu0
        %2466 = vmatprep.mubr.bf16.mxu0 %v2200
        %2467 = vmatmul.mubr.bf16.gmra.mrb[0].mxu0 %v2199
        %v2468 = vpop.f32.mrb[0].mxu0
        %v2469 = vadd.f32 0.0, %v2468
        %v2470 = vpop.f32.mrb[0].mxu0
        %v2471 = vpop.f32.mrb[0].mxu0
        %v2472 = vadd.f32 0.0, %v2471
        %v2473 = vpop.f32.mrb[0].mxu0
        %2474 = vdwg.mxu0
        %v2475 = vmul.f32 %v2252, %v2252
        %v2476 = vmul.f32 %v2255, %v2255
        %v2477 = vmul.f32 %v2260, %v2260
        %v2478 = vmul.f32 %v2263, %v2263
        %v2479 = vmul.f32 %v2268, %v2268
        %v2480 = vmul.f32 %v2271, %v2271
        %v2481 = vmul.f32 %v2276, %v2276
        %v2482 = vmul.f32 %v2279, %v2279
        %v2483 = vmul.f32 %v2284, %v2284
        %v2484 = vmul.f32 %v2287, %v2287
        %v2485 = vmul.f32 %v2292, %v2292
        %v2486 = vmul.f32 %v2295, %v2295
        %v2487 = vmul.f32 %v2300, %v2300
        %v2488 = vmul.f32 %v2303, %v2303
        %v2489 = vmul.f32 %v2308, %v2308
        %v2490 = vmul.f32 %v2311, %v2311
        %v2491 = vmul.f32 %v2316, %v2316
        %v2492 = vmul.f32 %v2319, %v2319
        %v2493 = vmul.f32 %v2324, %v2324
        %v2494 = vmul.f32 %v2327, %v2327
        %v2495 = vmul.f32 %v2332, %v2332
        %v2496 = vmul.f32 %v2335, %v2335
        %v2497 = vmul.f32 %v2340, %v2340
        %v2498 = vmul.f32 %v2343, %v2343
        %v2499 = vmul.f32 %v2381, %v2381
        %v2500 = vmul.f32 %v2384, %v2384
        %v2501 = vmul.f32 %v2389, %v2389
        %v2502 = vmul.f32 %v2392, %v2392
        %v2503 = vmul.f32 %v2397, %v2397
        %v2504 = vmul.f32 %v2400, %v2400
        %v2505 = vmul.f32 %v2405, %v2405
        %v2506 = vmul.f32 %v2408, %v2408
        %v2507 = vmul.f32 %v2413, %v2413
        %v2508 = vmul.f32 %v2416, %v2416
        %v2509 = vmul.f32 %v2421, %v2421
        %v2510 = vmul.f32 %v2424, %v2424
        %v2511 = vmul.f32 %v2429, %v2429
        %v2512 = vmul.f32 %v2432, %v2432
        %v2513 = vmul.f32 %v2437, %v2437
        %v2514 = vmul.f32 %v2440, %v2440
        %v2515 = vmul.f32 %v2445, %v2445
        %v2516 = vmul.f32 %v2448, %v2448
        %v2517 = vmul.f32 %v2453, %v2453
        %v2518 = vmul.f32 %v2456, %v2456
        %v2519 = vmul.f32 %v2461, %v2461
        %v2520 = vmul.f32 %v2464, %v2464
        %v2521 = vmul.f32 %v2469, %v2469
        %v2522 = vmul.f32 %v2472, %v2472
        %v2523 = vadd.f32 %v2475, %v2499
        %v2524 = vadd.f32 %v2476, %v2500
        %v2525 = vadd.f32 %v2477, %v2501
        %v2526 = vadd.f32 %v2478, %v2502
        %v2527 = vadd.f32 %v2479, %v2503
        %v2528 = vadd.f32 %v2480, %v2504
        %v2529 = vadd.f32 %v2481, %v2505
        %v2530 = vadd.f32 %v2482, %v2506
        %v2531 = vadd.f32 %v2483, %v2507
        %v2532 = vadd.f32 %v2484, %v2508
        %v2533 = vadd.f32 %v2485, %v2509
        %v2534 = vadd.f32 %v2486, %v2510
        %v2535 = vadd.f32 %v2487, %v2511
        %v2536 = vadd.f32 %v2488, %v2512
        %v2537 = vadd.f32 %v2489, %v2513
        %v2538 = vadd.f32 %v2490, %v2514
        %v2539 = vadd.f32 %v2491, %v2515
        %v2540 = vadd.f32 %v2492, %v2516
        %v2541 = vadd.f32 %v2493, %v2517
        %v2542 = vadd.f32 %v2494, %v2518
        %v2543 = vadd.f32 %v2495, %v2519
        %v2544 = vadd.f32 %v2496, %v2520
        %v2545 = vadd.f32 %v2497, %v2521
        %v2546 = vadd.f32 %v2498, %v2522
        %v2547 = vsel %vm526, %v2523, 0.0
        %v2548 = vsel %vm526, %v2527, 0.0
        %v2549 = vadd.f32 %v2547, %v2548
        %v2550 = vsel %vm526, %v2531, 0.0
        %v2551 = vadd.f32 %v2549, %v2550
        %v2552 = vsel %vm526, %v2535, 0.0
        %v2553 = vadd.f32 %v2551, %v2552
        %v2554 = vsel %vm526, %v2539, 0.0
        %v2555 = vadd.f32 %v2553, %v2554
        %v2556 = vsel %vm526, %v2543, 0.0
        %v2557 = vadd.f32 %v2555, %v2556
        %v2558 = vsel %vm526, %v2524, 0.0
        %v2559 = vsel %vm526, %v2528, 0.0
        %v2560 = vadd.f32 %v2558, %v2559
        %v2561 = vsel %vm526, %v2532, 0.0
        %v2562 = vadd.f32 %v2560, %v2561
        %v2563 = vsel %vm526, %v2536, 0.0
        %v2564 = vadd.f32 %v2562, %v2563
        %v2565 = vsel %vm526, %v2540, 0.0
        %v2566 = vadd.f32 %v2564, %v2565
        %v2567 = vsel %vm526, %v2544, 0.0
        %v2568 = vadd.f32 %v2566, %v2567
        %v2569 = vsel %vm526, %v2525, 0.0
        %v2570 = vsel %vm526, %v2529, 0.0
        %v2571 = vadd.f32 %v2569, %v2570
        %v2572 = vsel %vm526, %v2533, 0.0
        %v2573 = vadd.f32 %v2571, %v2572
        %v2574 = vsel %vm526, %v2537, 0.0
        %v2575 = vadd.f32 %v2573, %v2574
        %v2576 = vsel %vm526, %v2541, 0.0
        %v2577 = vadd.f32 %v2575, %v2576
        %v2578 = vsel %vm526, %v2545, 0.0
        %v2579 = vadd.f32 %v2577, %v2578
        %v2580 = vsel %vm526, %v2526, 0.0
        %v2581 = vsel %vm526, %v2530, 0.0
        %v2582 = vadd.f32 %v2580, %v2581
        %v2583 = vsel %vm526, %v2534, 0.0
        %v2584 = vadd.f32 %v2582, %v2583
        %v2585 = vsel %vm526, %v2538, 0.0
        %v2586 = vadd.f32 %v2584, %v2585
        %v2587 = vsel %vm526, %v2542, 0.0
        %v2588 = vadd.f32 %v2586, %v2587
        %v2589 = vsel %vm526, %v2546, 0.0
        %v2590 = vadd.f32 %v2588, %v2589
        %v2591 = vadd.f32 %v2557, 0.0
        %v2592 = vadd.f32 %v2568, 0.0
        %v2593 = vadd.f32 %v2579, 0.0
        %v2594 = vadd.f32 %v2590, 0.0
        %v2595 = vsel %vm526, %v975, 0.0
        %v2596 = vsel %vm526, %v976, 0.0
        %v2597 = vadd.f32 %v2595, %v2596
        %v2598 = vsel %vm526, %v977, 0.0
        %v2599 = vadd.f32 %v2597, %v2598
        %v2600 = vsel %vm526, %v978, 0.0
        %v2601 = vadd.f32 %v2599, %v2600
        %2602 = vadd.xlane.f32.xlu0 %v2601
        %v2603 = vpop.xlane.xlu0 %2602
        %v2604 = vrot.slane %v2603, 4
        %v2605 = vadd.f32 %v2603, %v2604
        %v2606 = vrot.slane %v2605, 2
        %v2607 = vadd.f32 %v2605, %v2606
        %v2608 = vrot.slane %v2607, 1
        %v2609 = vadd.f32 %v2607, %v2608
        %s2610 = vtos %v2609
        %v2611 = vsel %vm526, %v1257, 0.0
        %v2612 = vsel %vm526, %v1258, 0.0
        %v2613 = vadd.f32 %v2611, %v2612
        %v2614 = vsel %vm526, %v1259, 0.0
        %v2615 = vadd.f32 %v2613, %v2614
        %v2616 = vsel %vm526, %v1260, 0.0
        %v2617 = vadd.f32 %v2615, %v2616
        %2618 = vadd.xlane.f32.xlu0 %v2617
        %v2619 = vpop.xlane.xlu0 %2618
        %v2620 = vrot.slane %v2619, 4
        %v2621 = vadd.f32 %v2619, %v2620
        %v2622 = vrot.slane %v2621, 2
        %v2623 = vadd.f32 %v2621, %v2622
        %v2624 = vrot.slane %v2623, 1
        %v2625 = vadd.f32 %v2623, %v2624
        %s2626 = vtos %v2625
        %v2627 = vsel %vm526, %v757, 0.0
        %v2628 = vsel %vm526, %v758, 0.0
        %v2629 = vadd.f32 %v2627, %v2628
        %v2630 = vsel %vm526, %v759, 0.0
        %v2631 = vadd.f32 %v2629, %v2630
        %v2632 = vsel %vm526, %v760, 0.0
        %v2633 = vadd.f32 %v2631, %v2632
        %2634 = vadd.xlane.f32.xlu0 %v2633
        %v2635 = vpop.xlane.xlu0 %2634
        %v2636 = vrot.slane %v2635, 4
        %v2637 = vadd.f32 %v2635, %v2636
        %v2638 = vrot.slane %v2637, 2
        %v2639 = vadd.f32 %v2637, %v2638
        %v2640 = vrot.slane %v2639, 1
        %v2641 = vadd.f32 %v2639, %v2640
        %s2642 = vtos %v2641
        %v2643 = vsel %vm526, %v2591, 0.0
        %v2644 = vsel %vm526, %v2592, 0.0
        %v2645 = vadd.f32 %v2643, %v2644
        %v2646 = vsel %vm526, %v2593, 0.0
        %v2647 = vadd.f32 %v2645, %v2646
        %v2648 = vsel %vm526, %v2594, 0.0
        %v2649 = vadd.f32 %v2647, %v2648
        %2650 = vadd.xlane.f32.xlu0 %v2649
        %v2651 = vpop.xlane.xlu0 %2650
        %v2652 = vrot.slane %v2651, 4
        %v2653 = vadd.f32 %v2651, %v2652
        %v2654 = vrot.slane %v2653, 2
        %v2655 = vadd.f32 %v2653, %v2654
        %v2656 = vrot.slane %v2655, 1
        %v2657 = vadd.f32 %v2655, %v2656
        %s2658 = vtos %v2657
        %vm2659 = vcmp.eq.s32.totalorder %v497, 0
        %v2660 = vstv %s2610
        %v2661 = vsel %vm2659, %v2660, 0.0
        %vm2662 = vcmp.eq.s32.totalorder %v497, 1
        %v2663 = vstv %s2626
        %v2664 = vsel %vm2662, %v2663, 0.0
        %v2665 = vadd.f32 %v2661, %v2664
        %vm2666 = vcmp.eq.s32.totalorder %v497, 2
        %v2667 = vstv %s2642
        %v2668 = vsel %vm2666, %v2667, 0.0
        %v2669 = vadd.f32 %v2665, %v2668
        %vm2670 = vcmp.eq.s32.totalorder %v497, 3
        %v2671 = vstv %s2658
        %v2672 = vsel %vm2670, %v2671, 0.0
        %v2673 = vadd.f32 %v2669, %v2672
        %2674 = vst [vmem:[%s438] sm:$0x1] %v2673
        %s2675 = sand.u32 %s265, 1
        %s2676 = scalar_lea.sflag [#allocation3], %s2675
        %s2677 = sand.u32 %s265, 1
        %s2678 = scalar_lea.vmem [#allocation2], %s2677
        // Predicated region
        $region57: #{tpu_custom_call.1} parent=55 // pred_check
          %p2679 = pneg %p275
        $region58: #{tpu_custom_call.1} parent=55 // pred_check_branch
          %2681 = sbr.rel (%p2679) target = $region60
        $region59: #{tpu_custom_call.1} parent=55 // pred_region
          %s2683 = ssub.s32 16, 16
          %2684 = vsyncadd %s2676, %s2683
          %s2685 = smul.addr %s23, 16
          %s2686 = scalar_lea.hbm %s9, %s2685
          %s2688 = sshll.u32 %s2678, 4
          %s2689 = int_to_ptr.vmem [resolvable:$true] %s2688
          %2691 = dma.vmem_to_hbm [thread:$0]  %s2689, 16, %s2686, %s2676
        $region60: #{tpu_custom_call.1} parent=55 // pred_fallthru
          _
      $region56: #{tpu_custom_call.1} parent=5 // pred_fallthru
        _
      %p2692 = scmp.le.s32.totalorder 2, %s18
      // Predicated region
      $region61: #{tpu_custom_call.1} parent=5 // pred_check
        %p2693 = pneg %p2692
      $region62: #{tpu_custom_call.1} parent=5 // pred_check_branch
        %2695 = sbr.rel (%p2693) target = $region64
      $region63: #{tpu_custom_call.1} parent=5 // pred_region
        %s2696 = ssub.s32 %s18, 2
        // Predicated region
        $region65: #{tpu_custom_call.1} parent=63 // pred_check
          %p2697 = pneg %p281
        $region66: #{tpu_custom_call.1} parent=63 // pred_check_branch
          %2699 = sbr.rel (%p2697) target = $region68
        $region67: #{tpu_custom_call.1} parent=63 // pred_region
          %s2700 = sand.u32 %s266, 1
          %s2701 = scalar_lea.sflag [#allocation3], %s2700
          %s2702 = sand.u32 %s266, 1
          %s2703 = scalar_lea.vmem [#allocation2], %s2702
          %2704 = dma.done %s2701, 16
        $region68: #{tpu_custom_call.1} parent=63 // pred_fallthru
          _
      $region64: #{tpu_custom_call.1} parent=5 // pred_fallthru
        _
    $region6: #{tpu_custom_call.1} parent=1 // loop_footer
      %s22 = sadd.s32 1, %s18
    $region7: #{tpu_custom_call.1} parent=1 // loop_footer_branch
      %17 = sbr.rel target = $region3
    $region8: #{tpu_custom_call.1} parent=1 // loop_exit
      _
    %2705 = vsyncpa [#allocation3], 1
    %s2706 = scalar_lea.sflag [#allocation3], 1
    %2707 = vsyncpa %s2706, 1

</llo_original>
